<compile_context>
chip_gen: v5e
topology: v5e:2x2
jax: 0.10.0
libtpu: 0.0.40
codegen_flags: <defaults>
</compile_context>

<pallas_src>
import functools

import jax
import jax.numpy as jnp
from jax import lax
from jax.experimental import pallas as pl
from jax.experimental.pallas import tpu as pltpu


# MXU operand dtype (accumulation is always f32 via preferred_element_type).
MATMUL_DTYPE = jnp.bfloat16
# Residual-stream dtype carried between pallas_calls (HBM traffic halved).
ACT_DTYPE = jnp.bfloat16


# ----------------------------------------------------------------------------
# Per-generation tuning + single-buffering capability probe
# ----------------------------------------------------------------------------
@functools.lru_cache(maxsize=None)
def _chip_config():
    """(max_row_tile, vmem_limit_bytes) tuned per TPU generation.

    v5e/v6e (128 MiB VMEM): 512-row tiles, raised scoped-VMEM limit.
    v7x      (64 MiB VMEM): keep 256-row tiles under a tighter budget.
    """
    try:
        vmem = int(pltpu.get_tpu_info().vmem_capacity_bytes)
    except Exception:
        return 256, None
    if vmem >= 100 * 1024 * 1024:
        return 512, 96 * 1024 * 1024
    return 256, 48 * 1024 * 1024


def _probe_kernel(x_ref, o_ref):
    o_ref[...] = x_ref[...] * 2.0


@functools.lru_cache(maxsize=None)
def _single_buffer_ok():
    """Probe whether pipeline_mode=pl.Buffered(1) is supported on this runtime."""
    try:
        fn = pl.pallas_call(
            _probe_kernel,
            out_shape=jax.ShapeDtypeStruct((16, 128), jnp.float32),
            grid=(2,),
            in_specs=[pl.BlockSpec((8, 128), lambda i: (0, 0),
                                   pipeline_mode=pl.Buffered(1))],
            out_specs=pl.BlockSpec((8, 128), lambda i: (i, 0)),
            compiler_params=pltpu.CompilerParams(
                dimension_semantics=("parallel",)),
        )
        jax.block_until_ready(fn(jnp.ones((8, 128), jnp.float32)))
        return True
    except Exception:
        return False


def _const_spec(block_shape):
    """BlockSpec for a grid-invariant operand (weights / LN params / biases).

    Single-buffered when supported: the block is never re-fetched, so the
    second pipeline buffer is pure wasted VMEM (matters most on v7x).
    """
    index_map = lambda *_: (0,) * len(block_shape)
    if _single_buffer_ok():
        return pl.BlockSpec(block_shape, index_map,
                            pipeline_mode=pl.Buffered(1))
    return pl.BlockSpec(block_shape, index_map)


def _cparams(*semantics):
    limit = _chip_config()[1]
    if limit is None:
        return pltpu.CompilerParams(dimension_semantics=tuple(semantics))
    return pltpu.CompilerParams(dimension_semantics=tuple(semantics),
                                vmem_limit_bytes=limit)


def _row_tiling(n):
    """One grid step when n fits a tile; otherwise per-chip-sized row tiles."""
    max_tile = _chip_config()[0]
    if n <= max_tile:
        return n, n
    return max_tile, pl.cdiv(n, max_tile) * max_tile


# ----------------------------------------------------------------------------
# Elementwise helpers used inside kernels (computed in f32)
# ----------------------------------------------------------------------------
def _erf(x):
    # Abramowitz & Stegun 7.1.26 rational approximation (|abs err| <= 1.5e-7);
    # small deviation from torch's exact erf GELU is expected.
    a1 = 0.254829592
    a2 = -0.284496736
    a3 = 1.421413741
    a4 = -1.453152027
    a5 = 1.061405429
    p = 0.3275911
    sgn = jnp.where(x >= 0.0, 1.0, -1.0)
    ax = jnp.abs(x)
    t = 1.0 / (1.0 + p * ax)
    poly = ((((a5 * t + a4) * t + a3) * t + a2) * t + a1) * t
    return sgn * (1.0 - poly * jnp.exp(-ax * ax))


def _gelu_exact(x):
    # Matches torch.nn.GELU() default (erf-based) GELU.
    return 0.5 * x * (1.0 + _erf(x * 0.7071067811865476))


def _layernorm_f32(x, g, b):
    # PyTorch nn.LayerNorm: biased variance, eps=1e-5 inside the sqrt.
    mean = jnp.mean(x, axis=-1, keepdims=True)
    var = jnp.mean((x - mean) ** 2, axis=-1, keepdims=True)
    return (x - mean) * lax.rsqrt(var + 1e-5) * g + b


def _mm(a, w):
    # MXU matmul: bf16 operands (weights already bf16), f32 accumulation.
    return jnp.dot(a.astype(MATMUL_DTYPE), w.astype(MATMUL_DTYPE),
                   preferred_element_type=jnp.float32)


# ----------------------------------------------------------------------------
# Shared attention body:   x + proj( multihead_causal_attn( ln1(x) ) )
# Heads processed with batched (leading head-axis) matmuls; 1/sqrt(D) is
# pre-folded into the Q columns of wqkv at the wrapper level.
# ----------------------------------------------------------------------------
def _attn_core(x, g_ref, b_ref, wqkv_ref, wp_ref, bp_ref, n_head):
    t = x.shape[0]
    hd = wqkv_ref.shape[1] // 3
    d = hd // n_head

    h = _layernorm_f32(x, g_ref[...].astype(jnp.float32),
                       b_ref[...].astype(jnp.float32))
    qkv = _mm(h, wqkv_ref[...])                                    # (T, 3*H*D)

    # Head-stacked operands (H, T, D). The stack is cheap static slicing;
    # the expensive work below is head-batched dot_generals.
    # TODO(synk): at real head_dim >= 64 use head-major QKV weight layout so
    #             this stacking disappears entirely.
    def heads(base):
        return jnp.stack([qkv[:, base + i * d: base + (i + 1) * d]
                          for i in range(n_head)],
                         axis=0).astype(MATMUL_DTYPE)

    q3 = heads(0)            # scale already folded into W_q
    k3 = heads(hd)
    v3 = heads(2 * hd)

    # Causal scores, softmax in f32.
    s = jnp.einsum('hqd,hkd->hqk', q3, k3,
                   preferred_element_type=jnp.float32)             # (H, T, T)
    row = lax.broadcasted_iota(jnp.int32, (t, t), 0)
    col = lax.broadcasted_iota(jnp.int32, (t, t), 1)
    s = jnp.where(col <= row, s, -jnp.inf)   # diagonal always unmasked -> no NaN
    s = s - jnp.max(s, axis=-1, keepdims=True)
    p = jnp.exp(s)
    p = p * pl.reciprocal(jnp.sum(p, axis=-1, keepdims=True), approx=True)

    o = jnp.einsum('hqk,hkd->hqd', p.astype(MATMUL_DTYPE), v3,
                   preferred_element_type=jnp.float32)             # (H, T, D)

    # Output projection: wp_ref is (H, D, C); sum over heads == concat @ Wp.
    y = jnp.einsum('hqd,hdc->hqc', o.astype(MATMUL_DTYPE), wp_ref[...],
                   preferred_element_type=jnp.float32)             # (H, T, C)
    y = jnp.sum(y, axis=0) + bp_ref[...].astype(jnp.float32)       # (T, C)
    return x + y


# ----------------------------------------------------------------------------
# Kernel 1: attention block (one grid step per batch item)
# ----------------------------------------------------------------------------
def _attn_block_kernel(x_ref, g_ref, b_ref, wqkv_ref, wp_ref, bp_ref, o_ref,
                       *, n_head):
    x = x_ref[0].astype(jnp.float32)                               # (T, C)
    o_ref[0] = _attn_core(x, g_ref, b_ref, wqkv_ref, wp_ref, bp_ref,
                          n_head).astype(o_ref.dtype)


def attention_block(x, ln_g, ln_b, wqkv, wproj3, bproj, n_head):
    B, T, C = x.shape
    H, D, _ = wproj3.shape
    return pl.pallas_call(
        functools.partial(_attn_block_kernel, n_head=n_head),
        out_shape=jax.ShapeDtypeStruct((B, T, C), ACT_DTYPE),
        grid=(B,),
        in_specs=[
            pl.BlockSpec((1, T, C), lambda b: (b, 0, 0)),
            _const_spec((1, C)),
            _const_spec((1, C)),
            _const_spec((C, 3 * H * D)),
            _const_spec((H, D, C)),
            _const_spec((1, C)),
        ],
        out_specs=pl.BlockSpec((1, T, C), lambda b: (b, 0, 0)),
        compiler_params=_cparams("parallel"),
    )(x, ln_g, ln_b, wqkv, wproj3, bproj)


# ----------------------------------------------------------------------------
# Kernel 1b: first attention block with the embedding add + ln_f fused in
#   x0 = ln_f(tok + pos);  out = x0 + proj(attn(ln1(x0)))
# ----------------------------------------------------------------------------
def _attn_block_embed_kernel(tok_ref, pos_ref, fg_ref, fb_ref, g_ref, b_ref,
                             wqkv_ref, wp_ref, bp_ref, o_ref, *, n_head):
    e = tok_ref[0].astype(jnp.float32) + pos_ref[...].astype(jnp.float32)
    # NOTE: the reference GPTLM applies ln_f *before* the blocks (kept as-is).
    x = _layernorm_f32(e, fg_ref[...].astype(jnp.float32),
                       fb_ref[...].astype(jnp.float32))
    o_ref[0] = _attn_core(x, g_ref, b_ref, wqkv_ref, wp_ref, bp_ref,
                          n_head).astype(o_ref.dtype)


def attention_block_embed(tok, pos, lnf_g, lnf_b, ln_g, ln_b, wqkv, wproj3,
                          bproj, n_head):
    B, T, C = tok.shape
    H, D, _ = wproj3.shape
    return pl.pallas_call(
        functools.partial(_attn_block_embed_kernel, n_head=n_head),
        out_shape=jax.ShapeDtypeStruct((B, T, C), ACT_DTYPE),
        grid=(B,),
        in_specs=[
            pl.BlockSpec((1, T, C), lambda b: (b, 0, 0)),
            _const_spec((T, C)),
            _const_spec((1, C)),
            _const_spec((1, C)),
            _const_spec((1, C)),
            _const_spec((1, C)),
            _const_spec((C, 3 * H * D)),
            _const_spec((H, D, C)),
            _const_spec((1, C)),
        ],
        out_specs=pl.BlockSpec((1, T, C), lambda b: (b, 0, 0)),
        compiler_params=_cparams("parallel"),
    )(tok, pos, lnf_g, lnf_b, ln_g, ln_b, wqkv, wproj3, bproj)


# ----------------------------------------------------------------------------
# Kernel 2: fused MLP block  out = x + fc2(GELU(fc1(ln2(x)))), row tiled
# ----------------------------------------------------------------------------
def _mlp_block_kernel(x_ref, g_ref, b_ref, w1_ref, b1_ref, w2_ref, b2_ref,
                      o_ref):
    x = x_ref[...].astype(jnp.float32)                             # (R, C)
    h = _layernorm_f32(x, g_ref[...].astype(jnp.float32),
                       b_ref[...].astype(jnp.float32))
    f = _mm(h, w1_ref[...]) + b1_ref[...].astype(jnp.float32)
    f = _gelu_exact(f)
    y = _mm(f, w2_ref[...]) + b2_ref[...].astype(jnp.float32)
    o_ref[...] = (x + y).astype(o_ref.dtype)


def mlp_block(x, ln_g, ln_b, w1, b1, w2, b2):
    B, T, C = x.shape
    n = B * T
    hidden = w1.shape[1]
    x2 = x.reshape(n, C)
    tile, n_pad = _row_tiling(n)
    if n_pad != n:
        x2 = jnp.pad(x2, ((0, n_pad - n), (0, 0)))
    out = pl.pallas_call(
        _mlp_block_kernel,
        out_shape=jax.ShapeDtypeStruct((n_pad, C), ACT_DTYPE),
        grid=(n_pad // tile,),
        in_specs=[
            pl.BlockSpec((tile, C), lambda i: (i, 0)),
            _const_spec((1, C)),
            _const_spec((1, C)),
            _const_spec((C, hidden)),
            _const_spec((1, hidden)),
            _const_spec((hidden, C)),
            _const_spec((1, C)),
        ],
        out_specs=pl.BlockSpec((tile, C), lambda i: (i, 0)),
        compiler_params=_cparams("parallel"),
    )(x2, ln_g, ln_b, w1, b1, w2, b2)
    return out[:n].reshape(B, T, C)


# ----------------------------------------------------------------------------
# Kernel 3: lm_head  y = x @ W + b, tiled over rows AND vocab columns
# ----------------------------------------------------------------------------
def _linear_kernel(x_ref, w_ref, b_ref, o_ref):
    y = _mm(x_ref[...].astype(jnp.float32), w_ref[...]) \
        + b_ref[...].astype(jnp.float32)
    o_ref[...] = y.astype(o_ref.dtype)


def linear(x2, w, b):
    n, cin = x2.shape
    cout = w.shape[1]
    row_tile, n_pad = _row_tiling(n)
    if cout <= 1024:
        col_tile, cout_pad = cout, cout
    else:
        col_tile = 512
        cout_pad = pl.cdiv(cout, col_tile) * col_tile
    xp = jnp.pad(x2, ((0, n_pad - n), (0, 0))) if n_pad != n else x2
    wp = jnp.pad(w, ((0, 0), (0, cout_pad - cout))) if cout_pad != cout else w
    bp = b.reshape(1, cout)
    if cout_pad != cout:
        bp = jnp.pad(bp, ((0, 0), (0, cout_pad - cout)))
    out = pl.pallas_call(
        _linear_kernel,
        out_shape=jax.ShapeDtypeStruct((n_pad, cout_pad), jnp.float32),
        grid=(n_pad // row_tile, cout_pad // col_tile),
        in_specs=[
            pl.BlockSpec((row_tile, cin), lambda i, j: (i, 0)),
            pl.BlockSpec((cin, col_tile), lambda i, j: (0, j)),
            pl.BlockSpec((1, col_tile), lambda i, j: (0, j)),
        ],
        out_specs=pl.BlockSpec((row_tile, col_tile), lambda i, j: (i, j)),
        compiler_params=_cparams("parallel", "parallel"),
    )(xp, wp, bp)
    return out[:n, :cout]


# ----------------------------------------------------------------------------
# Kernel 4: standalone (tok+pos) -> ln_f  (only used if n_layer == 0)
# ----------------------------------------------------------------------------
def _embed_ln_kernel(tok_ref, pos_ref, g_ref, b_ref, o_ref):
    x = tok_ref[0].astype(jnp.float32) + pos_ref[...].astype(jnp.float32)
    y = _layernorm_f32(x, g_ref[...].astype(jnp.float32),
                       b_ref[...].astype(jnp.float32))
    o_ref[0] = y.astype(o_ref.dtype)


def embed_layernorm(tok, pos, gamma, beta):
    B, T, C = tok.shape
    return pl.pallas_call(
        _embed_ln_kernel,
        out_shape=jax.ShapeDtypeStruct((B, T, C), ACT_DTYPE),
        grid=(B,),
        in_specs=[
            pl.BlockSpec((1, T, C), lambda b: (b, 0, 0)),
            _const_spec((T, C)),
            _const_spec((1, C)),
            _const_spec((1, C)),
        ],
        out_specs=pl.BlockSpec((1, T, C), lambda b: (b, 0, 0)),
        compiler_params=_cparams("parallel"),
    )(tok, pos, gamma, beta)


# ----------------------------------------------------------------------------
# Parameter init (deterministic, mirrors GPTLM._init_weights)
# ----------------------------------------------------------------------------
def init_params(key, vocab_size, n_embed, block_size, n_head, n_layer):
    head_size = n_embed // n_head
    hidden = 4 * n_embed
    hd = n_head * head_size

    def normal(k, shape, std):
        return std * jax.random.normal(k, shape, dtype=jnp.float32)

    k_tok, k_pos, k_head, *k_blocks = jax.random.split(key, 3 + n_layer)
    params = {
        "tok_emb": normal(k_tok, (vocab_size, n_embed), 0.2),
        "pos_emb": normal(k_pos, (block_size, n_embed), 0.2),
        "ln_f_g": jnp.ones((n_embed,), jnp.float32),
        "ln_f_b": jnp.zeros((n_embed,), jnp.float32),
        # lm_head stored as (in, out) so kernels compute x @ W + b
        "head_w": normal(k_head, (n_embed, vocab_size), 0.02),
        "head_b": jnp.zeros((vocab_size,), jnp.float32),
        "blocks": [],
    }
    for kb in k_blocks:
        kq, kk, kv, kp, k1, k2 = jax.random.split(kb, 6)
        wq = normal(kq, (n_embed, hd), 0.02)   # heads packed along out dim
        wk = normal(kk, (n_embed, hd), 0.02)
        wv = normal(kv, (n_embed, hd), 0.02)
        params["blocks"].append({
            "wqkv": jnp.concatenate([wq, wk, wv], axis=1),   # (C, 3*H*D)
            "proj_w": normal(kp, (hd, n_embed), 0.02),
            "proj_b": jnp.zeros((n_embed,), jnp.float32),
            "ln1_g": jnp.ones((n_embed,), jnp.float32),
            "ln1_b": jnp.zeros((n_embed,), jnp.float32),
            "ln2_g": jnp.ones((n_embed,), jnp.float32),
            "ln2_b": jnp.zeros((n_embed,), jnp.float32),
            "fc1_w": normal(k1, (n_embed, hidden), 0.02),
            "fc1_b": jnp.zeros((hidden,), jnp.float32),
            "fc2_w": normal(k2, (hidden, n_embed), 0.02),
            "fc2_b": jnp.zeros((n_embed,), jnp.float32),
        })
    return params


def prepare_params(params, n_head):
    """One-time wrapper-level prep: bf16 weights, scale folded into W_q,
    proj reshaped to (H, D, C), LN params / biases reshaped to (1, dim)."""
    C = params["tok_emb"].shape[1]
    prepared = {
        "tok_emb": params["tok_emb"],
        "pos_emb": params["pos_emb"],
        "ln_f_g": params["ln_f_g"].reshape(1, C),
        "ln_f_b": params["ln_f_b"].reshape(1, C),
        "head_w": params["head_w"].astype(MATMUL_DTYPE),
        "head_b": params["head_b"],
        "blocks": [],
    }
    for blk in params["blocks"]:
        wqkv = blk["wqkv"]                       # (C, 3*H*D)
        hd = wqkv.shape[1] // 3
        d = hd // n_head
        scale = float(d) ** -0.5
        wqkv = wqkv.at[:, :hd].multiply(scale)   # fold 1/sqrt(D) into Q
        hidden = blk["fc1_w"].shape[1]
        prepared["blocks"].append({
            "wqkv": wqkv.astype(MATMUL_DTYPE),
            "proj_w": blk["proj_w"].reshape(n_head, d, C).astype(MATMUL_DTYPE),
            "proj_b": blk["proj_b"].reshape(1, C),
            "ln1_g": blk["ln1_g"].reshape(1, C),
            "ln1_b": blk["ln1_b"].reshape(1, C),
            "ln2_g": blk["ln2_g"].reshape(1, C),
            "ln2_b": blk["ln2_b"].reshape(1, C),
            "fc1_w": blk["fc1_w"].astype(MATMUL_DTYPE),
            "fc1_b": blk["fc1_b"].reshape(1, hidden),
            "fc2_w": blk["fc2_w"].astype(MATMUL_DTYPE),
            "fc2_b": blk["fc2_b"].reshape(1, C),
        })
    return prepared


# ----------------------------------------------------------------------------
# Forward pass (== GPTLM.forward with targets=None)
# ----------------------------------------------------------------------------
def gpt_forward(params, idx, n_head):
    B, T = idx.shape
    # Embedding gathers are glue (plain JAX); everything downstream is Pallas.
    tok = params["tok_emb"][idx]                 # (B, T, C) f32
    pos = params["pos_emb"][:T]                  # (T, C)    f32

    blocks = params["blocks"]
    if blocks:
        b0 = blocks[0]
        # First block fuses (tok+pos) -> ln_f -> [ln1 -> attn -> proj] + resid.
        x = attention_block_embed(tok, pos, params["ln_f_g"], params["ln_f_b"],
                                  b0["ln1_g"], b0["ln1_b"], b0["wqkv"],
                                  b0["proj_w"], b0["proj_b"], n_head)
        x = mlp_block(x, b0["ln2_g"], b0["ln2_b"], b0["fc1_w"], b0["fc1_b"],
                      b0["fc2_w"], b0["fc2_b"])
        for blk in blocks[1:]:
            x = attention_block(x, blk["ln1_g"], blk["ln1_b"], blk["wqkv"],
                                blk["proj_w"], blk["proj_b"], n_head)
            x = mlp_block(x, blk["ln2_g"], blk["ln2_b"], blk["fc1_w"],
                          blk["fc1_b"], blk["fc2_w"], blk["fc2_b"])
    else:
        x = embed_layernorm(tok, pos, params["ln_f_g"], params["ln_f_b"])

    logits = linear(x.reshape(B * T, -1), params["head_w"], params["head_b"])
    return logits.reshape(B, T, -1), None


# ----------------------------------------------------------------------------
if __name__ == "__main__":
    vocab_size = 64
    n_embed = 32
    block_size = 8
    n_head = 4
    n_layer = 2
    B, T = 2, 8  # T == block_size (full context window)

    key = jax.random.PRNGKey(0)
    pkey, ikey = jax.random.split(key)
    raw_params = init_params(pkey, vocab_size, n_embed, block_size, n_head,
                             n_layer)
    params = prepare_params(raw_params, n_head)
    idx = jax.random.randint(ikey, (B, T), 0, vocab_size, dtype=jnp.int32)

    logits, loss = gpt_forward(params, idx, n_head)
    logits = jax.block_until_ready(logits)

    assert logits.shape == (B, T, vocab_size), logits.shape
    assert jnp.all(jnp.isfinite(logits))
    print("KERNEL_OK")
</pallas_src>

<mosaic_0001>
module attributes {stable_mosaic.version = 11 : i64} {
  func.func @_probe_kernel(%arg0: i32, %arg1: memref<8x128xf32, #tpu.memory_space<vmem>>, %arg2: memref<8x128xf32, #tpu.memory_space<vmem>>) attributes {dimension_semantics = [#tpu.dimension_semantics<parallel>], iteration_bounds = array<i64: 2>, scalar_prefetch = 0 : i64, scratch_operands = 0 : i64, tpu.core_type = #tpu.core_type<tc>, window_params = [{pipeline_mode = #tpu.pipeline_mode<synchronous>, transform_indices = @transform_0, window_bounds = array<i64: 8, 128>}, {transform_indices = @transform_1, window_bounds = array<i64: 8, 128>}]} {
    %c0 = arith.constant 0 : index
    %c0_0 = arith.constant 0 : index
    %0 = vector.load %arg1[%c0, %c0_0] : memref<8x128xf32, #tpu.memory_space<vmem>>, vector<8x128xf32>
    %cst = arith.constant 2.000000e+00 : f32
    %1 = vector.broadcast %cst : f32 to vector<8x128xf32>
    %2 = arith.mulf %0, %1 : vector<8x128xf32>
    %c0_1 = arith.constant 0 : index
    %c0_2 = arith.constant 0 : index
    %3 = vector.load %arg2[%c0_1, %c0_2] : memref<8x128xf32, #tpu.memory_space<vmem>>, vector<8x128xf32>
    tpu.vector_store %arg2[%c0_1, %c0_2], %2 {strides = array<i32>} : memref<8x128xf32, #tpu.memory_space<vmem>>, vector<8x128xf32>,
    return
  }
  func.func @transform_0(%arg0: i32) -> (i32, i32) {
    %c0_i32 = arith.constant 0 : i32
    %c0_i32_0 = arith.constant 0 : i32
    %c0_i32_1 = arith.constant 0 : i32
    return %c0_i32, %c0_i32_0 : i32, i32
  }
  func.func @transform_1(%arg0: i32) -> (i32, i32) {
    %c0_i32 = arith.constant 0 : i32
    %c0_i32_0 = arith.constant 0 : i32
    return %arg0, %c0_i32 : i32, i32
  }
}

module attributes {stable_mosaic.version = 11 : i64} {
  func.func @_attn_block_embed_kernel(%arg0: i32, %arg1: memref<1x8x32xf32, #tpu.memory_space<vmem>>, %arg2: memref<8x32xf32, #tpu.memory_space<vmem>>, %arg3: memref<1x32xf32, #tpu.memory_space<vmem>>, %arg4: memref<1x32xf32, #tpu.memory_space<vmem>>, %arg5: memref<1x32xf32, #tpu.memory_space<vmem>>, %arg6: memref<1x32xf32, #tpu.memory_space<vmem>>, %arg7: memref<32x96xbf16, #tpu.memory_space<vmem>>, %arg8: memref<4x8x32xbf16, #tpu.memory_space<vmem>>, %arg9: memref<1x32xf32, #tpu.memory_space<vmem>>, %arg10: memref<1x8x32xbf16, #tpu.memory_space<vmem>>) attributes {dimension_semantics = [#tpu.dimension_semantics<parallel>], iteration_bounds = array<i64: 2>, scalar_prefetch = 0 : i64, scratch_operands = 0 : i64, tpu.core_type = #tpu.core_type<tc>, window_params = [{transform_indices = @transform_0, window_bounds = array<i64: 1, 8, 32>}, {pipeline_mode = #tpu.pipeline_mode<synchronous>, transform_indices = @transform_1, window_bounds = array<i64: 8, 32>}, {pipeline_mode = #tpu.pipeline_mode<synchronous>, transform_indices = @transform_2, window_bounds = array<i64: 1, 32>}, {pipeline_mode = #tpu.pipeline_mode<synchronous>, transform_indices = @transform_3, window_bounds = array<i64: 1, 32>}, {pipeline_mode = #tpu.pipeline_mode<synchronous>, transform_indices = @transform_4, window_bounds = array<i64: 1, 32>}, {pipeline_mode = #tpu.pipeline_mode<synchronous>, transform_indices = @transform_5, window_bounds = array<i64: 1, 32>}, {pipeline_mode = #tpu.pipeline_mode<synchronous>, transform_indices = @transform_6, window_bounds = array<i64: 32, 96>}, {pipeline_mode = #tpu.pipeline_mode<synchronous>, transform_indices = @transform_7, window_bounds = array<i64: 4, 8, 32>}, {pipeline_mode = #tpu.pipeline_mode<synchronous>, transform_indices = @transform_8, window_bounds = array<i64: 1, 32>}, {transform_indices = @transform_9, window_bounds = array<i64: 1, 8, 32>}]} {
    %c0 = arith.constant 0 : index
    %c0_0 = arith.constant 0 : index
    %c0_1 = arith.constant 0 : index
    %0 = vector.load %arg1[%c0, %c0_0, %c0_1] : memref<1x8x32xf32, #tpu.memory_space<vmem>>, vector<1x8x32xf32>
    %1 = vector.shape_cast %0 : vector<1x8x32xf32> to vector<8x32xf32>
    %c0_2 = arith.constant 0 : index
    %c0_3 = arith.constant 0 : index
    %2 = vector.load %arg2[%c0_2, %c0_3] : memref<8x32xf32, #tpu.memory_space<vmem>>, vector<8x32xf32>
    %3 = arith.addf %1, %2 : vector<8x32xf32>
    %c0_4 = arith.constant 0 : index
    %c0_5 = arith.constant 0 : index
    %4 = vector.load %arg3[%c0_4, %c0_5] : memref<1x32xf32, #tpu.memory_space<vmem>>, vector<1x32xf32>
    %c0_6 = arith.constant 0 : index
    %c0_7 = arith.constant 0 : index
    %5 = vector.load %arg4[%c0_6, %c0_7] : memref<1x32xf32, #tpu.memory_space<vmem>>, vector<1x32xf32>
    %cst = arith.constant dense<0.000000e+00> : vector<8xf32>
    %6 = vector.multi_reduction <add>, %3, %cst [1] : vector<8x32xf32> to vector<8xf32>
    %7 = vector.shape_cast %6 : vector<8xf32> to vector<8x1xf32>
    %cst_8 = arith.constant 3.200000e+01 : f32
    %8 = vector.broadcast %cst_8 : f32 to vector<8x1xf32>
    %9 = arith.divf %7, %8 : vector<8x1xf32>
    %10 = vector.broadcast %9 : vector<8x1xf32> to vector<8x32xf32>
    %11 = arith.subf %3, %10 : vector<8x32xf32>
    %12 = arith.mulf %11, %11 : vector<8x32xf32>
    %cst_9 = arith.constant dense<0.000000e+00> : vector<8xf32>
    %13 = vector.multi_reduction <add>, %12, %cst_9 [1] : vector<8x32xf32> to vector<8xf32>
    %14 = vector.shape_cast %13 : vector<8xf32> to vector<8x1xf32>
    %cst_10 = arith.constant 3.200000e+01 : f32
    %15 = vector.broadcast %cst_10 : f32 to vector<8x1xf32>
    %16 = arith.divf %14, %15 : vector<8x1xf32>
    %17 = vector.broadcast %9 : vector<8x1xf32> to vector<8x32xf32>
    %18 = arith.subf %3, %17 : vector<8x32xf32>
    %cst_11 = arith.constant 9.99999974E-6 : f32
    %19 = vector.broadcast %cst_11 : f32 to vector<8x1xf32>
    %20 = arith.addf %16, %19 : vector<8x1xf32>
    %21 = math.rsqrt %20 : vector<8x1xf32>
    %22 = vector.broadcast %21 : vector<8x1xf32> to vector<8x32xf32>
    %23 = arith.mulf %18, %22 : vector<8x32xf32>
    %24 = vector.broadcast %4 : vector<1x32xf32> to vector<8x32xf32>
    %25 = arith.mulf %23, %24 : vector<8x32xf32>
    %26 = vector.broadcast %5 : vector<1x32xf32> to vector<8x32xf32>
    %27 = arith.addf %25, %26 : vector<8x32xf32>
    %c0_12 = arith.constant 0 : index
    %c0_13 = arith.constant 0 : index
    %28 = vector.load %arg5[%c0_12, %c0_13] : memref<1x32xf32, #tpu.memory_space<vmem>>, vector<1x32xf32>
    %c0_14 = arith.constant 0 : index
    %c0_15 = arith.constant 0 : index
    %29 = vector.load %arg6[%c0_14, %c0_15] : memref<1x32xf32, #tpu.memory_space<vmem>>, vector<1x32xf32>
    %cst_16 = arith.constant dense<0.000000e+00> : vector<8xf32>
    %30 = vector.multi_reduction <add>, %27, %cst_16 [1] : vector<8x32xf32> to vector<8xf32>
    %31 = vector.shape_cast %30 : vector<8xf32> to vector<8x1xf32>
    %cst_17 = arith.constant 3.200000e+01 : f32
    %32 = vector.broadcast %cst_17 : f32 to vector<8x1xf32>
    %33 = arith.divf %31, %32 : vector<8x1xf32>
    %34 = vector.broadcast %33 : vector<8x1xf32> to vector<8x32xf32>
    %35 = arith.subf %27, %34 : vector<8x32xf32>
    %36 = arith.mulf %35, %35 : vector<8x32xf32>
    %cst_18 = arith.constant dense<0.000000e+00> : vector<8xf32>
    %37 = vector.multi_reduction <add>, %36, %cst_18 [1] : vector<8x32xf32> to vector<8xf32>
    %38 = vector.shape_cast %37 : vector<8xf32> to vector<8x1xf32>
    %cst_19 = arith.constant 3.200000e+01 : f32
    %39 = vector.broadcast %cst_19 : f32 to vector<8x1xf32>
    %40 = arith.divf %38, %39 : vector<8x1xf32>
    %41 = vector.broadcast %33 : vector<8x1xf32> to vector<8x32xf32>
    %42 = arith.subf %27, %41 : vector<8x32xf32>
    %cst_20 = arith.constant 9.99999974E-6 : f32
    %43 = vector.broadcast %cst_20 : f32 to vector<8x1xf32>
    %44 = arith.addf %40, %43 : vector<8x1xf32>
    %45 = math.rsqrt %44 : vector<8x1xf32>
    %46 = vector.broadcast %45 : vector<8x1xf32> to vector<8x32xf32>
    %47 = arith.mulf %42, %46 : vector<8x32xf32>
    %48 = vector.broadcast %28 : vector<1x32xf32> to vector<8x32xf32>
    %49 = arith.mulf %47, %48 : vector<8x32xf32>
    %50 = vector.broadcast %29 : vector<1x32xf32> to vector<8x32xf32>
    %51 = arith.addf %49, %50 : vector<8x32xf32>
    %c0_21 = arith.constant 0 : index
    %c0_22 = arith.constant 0 : index
    %52 = vector.load %arg7[%c0_21, %c0_22] : memref<32x96xbf16, #tpu.memory_space<vmem>>, vector<32x96xbf16>
    %53 = arith.truncf %51 : vector<8x32xf32> to vector<8x32xbf16>
    %cst_23 = arith.constant dense<0.000000e+00> : vector<8x96xf32>
    %54 = tpu.matmul %53, %52, %cst_23 {dimension_numbers = #tpu.dot_dimension_numbers<[1], [0], [0], [1], [0, 0, 1, 1], [], []>} : vector<8x32xbf16>, vector<32x96xbf16>, vector<8x96xf32> -> vector<8x96xf32>
    %55 = vector.extract_strided_slice %54 {offsets = [0, 0], sizes = [8, 8], strides = [1, 1]} : vector<8x96xf32> to vector<8x8xf32>
    %56 = vector.extract_strided_slice %54 {offsets = [0, 8], sizes = [8, 8], strides = [1, 1]} : vector<8x96xf32> to vector<8x8xf32>
    %57 = vector.extract_strided_slice %54 {offsets = [0, 16], sizes = [8, 8], strides = [1, 1]} : vector<8x96xf32> to vector<8x8xf32>
    %58 = vector.extract_strided_slice %54 {offsets = [0, 24], sizes = [8, 8], strides = [1, 1]} : vector<8x96xf32> to vector<8x8xf32>
    %59 = vector.shape_cast %55 : vector<8x8xf32> to vector<1x8x8xf32>
    %60 = vector.shape_cast %56 : vector<8x8xf32> to vector<1x8x8xf32>
    %61 = vector.shape_cast %57 : vector<8x8xf32> to vector<1x8x8xf32>
    %62 = vector.shape_cast %58 : vector<8x8xf32> to vector<1x8x8xf32>
    %63 = tpu.concatenate %59, %60, %61, %62 in 0 : vector<1x8x8xf32>, vector<1x8x8xf32>, vector<1x8x8xf32>, vector<1x8x8xf32> -> vector<4x8x8xf32>
    %64 = arith.truncf %63 : vector<4x8x8xf32> to vector<4x8x8xbf16>
    %65 = vector.extract_strided_slice %54 {offsets = [0, 32], sizes = [8, 8], strides = [1, 1]} : vector<8x96xf32> to vector<8x8xf32>
    %66 = vector.extract_strided_slice %54 {offsets = [0, 40], sizes = [8, 8], strides = [1, 1]} : vector<8x96xf32> to vector<8x8xf32>
    %67 = vector.extract_strided_slice %54 {offsets = [0, 48], sizes = [8, 8], strides = [1, 1]} : vector<8x96xf32> to vector<8x8xf32>
    %68 = vector.extract_strided_slice %54 {offsets = [0, 56], sizes = [8, 8], strides = [1, 1]} : vector<8x96xf32> to vector<8x8xf32>
    %69 = vector.shape_cast %65 : vector<8x8xf32> to vector<1x8x8xf32>
    %70 = vector.shape_cast %66 : vector<8x8xf32> to vector<1x8x8xf32>
    %71 = vector.shape_cast %67 : vector<8x8xf32> to vector<1x8x8xf32>
    %72 = vector.shape_cast %68 : vector<8x8xf32> to vector<1x8x8xf32>
    %73 = tpu.concatenate %69, %70, %71, %72 in 0 : vector<1x8x8xf32>, vector<1x8x8xf32>, vector<1x8x8xf32>, vector<1x8x8xf32> -> vector<4x8x8xf32>
    %74 = arith.truncf %73 : vector<4x8x8xf32> to vector<4x8x8xbf16>
    %75 = vector.extract_strided_slice %54 {offsets = [0, 64], sizes = [8, 8], strides = [1, 1]} : vector<8x96xf32> to vector<8x8xf32>
    %76 = vector.extract_strided_slice %54 {offsets = [0, 72], sizes = [8, 8], strides = [1, 1]} : vector<8x96xf32> to vector<8x8xf32>
    %77 = vector.extract_strided_slice %54 {offsets = [0, 80], sizes = [8, 8], strides = [1, 1]} : vector<8x96xf32> to vector<8x8xf32>
    %78 = vector.extract_strided_slice %54 {offsets = [0, 88], sizes = [8, 8], strides = [1, 1]} : vector<8x96xf32> to vector<8x8xf32>
    %79 = vector.shape_cast %75 : vector<8x8xf32> to vector<1x8x8xf32>
    %80 = vector.shape_cast %76 : vector<8x8xf32> to vector<1x8x8xf32>
    %81 = vector.shape_cast %77 : vector<8x8xf32> to vector<1x8x8xf32>
    %82 = vector.shape_cast %78 : vector<8x8xf32> to vector<1x8x8xf32>
    %83 = tpu.concatenate %79, %80, %81, %82 in 0 : vector<1x8x8xf32>, vector<1x8x8xf32>, vector<1x8x8xf32>, vector<1x8x8xf32> -> vector<4x8x8xf32>
    %84 = arith.truncf %83 : vector<4x8x8xf32> to vector<4x8x8xbf16>
    "tpu.trace_start"() <{level = 10 : i32, message = "hqd,hkd->hqk"}> : () -> ()
    %cst_24 = arith.constant dense<0.000000e+00> : vector<4x8x8xf32>
    %85 = tpu.matmul %64, %74, %cst_24 {dimension_numbers = #tpu.dot_dimension_numbers<[2], [2], [1], [1], [0, 0, 0, 1, 1, 1], [0], [0]>} : vector<4x8x8xbf16>, vector<4x8x8xbf16>, vector<4x8x8xf32> -> vector<4x8x8xf32>
    "tpu.trace_stop"() : () -> ()
    %86 = tpu.iota {dimensions = array<i32: 0>} : vector<8x8xi32>
    %87 = tpu.iota {dimensions = array<i32: 1>} : vector<8x8xi32>
    %88 = arith.cmpi sle, %87, %86 : vector<8x8xi32>
    %cst_25 = arith.constant 0xFF800000 : f32
    %89 = vector.shape_cast %88 : vector<8x8xi1> to vector<1x8x8xi1>
    %90 = vector.broadcast %89 : vector<1x8x8xi1> to vector<4x8x8xi1>
    %91 = vector.broadcast %cst_25 : f32 to vector<4x8x8xf32>
    %92 = arith.select %90, %85, %91 : vector<4x8x8xi1>, vector<4x8x8xf32>
    %cst_26 = arith.constant dense<0xFF800000> : vector<4x8xf32>
    %93 = vector.multi_reduction <maximumf>, %92, %cst_26 [2] : vector<4x8x8xf32> to vector<4x8xf32>
    %94 = vector.shape_cast %93 : vector<4x8xf32> to vector<4x8x1xf32>
    %95 = vector.broadcast %94 : vector<4x8x1xf32> to vector<4x8x8xf32>
    %96 = arith.subf %92, %95 : vector<4x8x8xf32>
    %97 = math.exp %96 : vector<4x8x8xf32>
    %cst_27 = arith.constant dense<0.000000e+00> : vector<4x8xf32>
    %98 = vector.multi_reduction <add>, %97, %cst_27 [2] : vector<4x8x8xf32> to vector<4x8xf32>
    %99 = vector.shape_cast %98 : vector<4x8xf32> to vector<4x8x1xf32>
    %100 = tpu.reciprocal %99 {approx = true} : vector<4x8x1xf32> -> vector<4x8x1xf32>
    %101 = vector.broadcast %100 : vector<4x8x1xf32> to vector<4x8x8xf32>
    %102 = arith.mulf %97, %101 : vector<4x8x8xf32>
    %103 = arith.truncf %102 : vector<4x8x8xf32> to vector<4x8x8xbf16>
    "tpu.trace_start"() <{level = 10 : i32, message = "hqk,hkd->hqd"}> : () -> ()
    %cst_28 = arith.constant dense<0.000000e+00> : vector<4x8x8xf32>
    %104 = tpu.matmul %103, %84, %cst_28 {dimension_numbers = #tpu.dot_dimension_numbers<[2], [1], [1], [2], [0, 0, 0, 1, 1, 2], [0], [0]>} : vector<4x8x8xbf16>, vector<4x8x8xbf16>, vector<4x8x8xf32> -> vector<4x8x8xf32>
    "tpu.trace_stop"() : () -> ()
    %105 = arith.truncf %104 : vector<4x8x8xf32> to vector<4x8x8xbf16>
    %c0_29 = arith.constant 0 : index
    %c0_30 = arith.constant 0 : index
    %c0_31 = arith.constant 0 : index
    %106 = vector.load %arg8[%c0_29, %c0_30, %c0_31] : memref<4x8x32xbf16, #tpu.memory_space<vmem>>, vector<4x8x32xbf16>
    "tpu.trace_start"() <{level = 10 : i32, message = "hqd,hdc->hqc"}> : () -> ()
    %cst_32 = arith.constant dense<0.000000e+00> : vector<4x8x32xf32>
    %107 = tpu.matmul %105, %106, %cst_32 {dimension_numbers = #tpu.dot_dimension_numbers<[2], [1], [1], [2], [0, 0, 0, 1, 1, 2], [0], [0]>} : vector<4x8x8xbf16>, vector<4x8x32xbf16>, vector<4x8x32xf32> -> vector<4x8x32xf32>
    "tpu.trace_stop"() : () -> ()
    %cst_33 = arith.constant dense<0.000000e+00> : vector<8x32xf32>
    %108 = vector.multi_reduction <add>, %107, %cst_33 [0] : vector<4x8x32xf32> to vector<8x32xf32>
    %c0_34 = arith.constant 0 : index
    %c0_35 = arith.constant 0 : index
    %109 = vector.load %arg9[%c0_34, %c0_35] : memref<1x32xf32, #tpu.memory_space<vmem>>, vector<1x32xf32>
    %110 = vector.broadcast %109 : vector<1x32xf32> to vector<8x32xf32>
    %111 = arith.addf %108, %110 : vector<8x32xf32>
    %112 = arith.addf %27, %111 : vector<8x32xf32>
    %113 = arith.truncf %112 : vector<8x32xf32> to vector<8x32xbf16>
    %c0_36 = arith.constant 0 : index
    %c0_37 = arith.constant 0 : index
    %c0_38 = arith.constant 0 : index
    %114 = vector.load %arg10[%c0_36, %c0_37, %c0_38] : memref<1x8x32xbf16, #tpu.memory_space<vmem>>, vector<1x8x32xbf16>
    %115 = vector.shape_cast %114 : vector<1x8x32xbf16> to vector<8x32xbf16>
    %116 = vector.shape_cast %113 : vector<8x32xbf16> to vector<1x8x32xbf16>
    tpu.vector_store %arg10[%c0_36, %c0_37, %c0_38], %116 {strides = array<i32>} : memref<1x8x32xbf16, #tpu.memory_space<vmem>>, vector<1x8x32xbf16>,
    return
  }
  func.func @transform_0(%arg0: i32) -> (i32, i32, i32) {
    %c0_i32 = arith.constant 0 : i32
    %c0_i32_0 = arith.constant 0 : i32
    %c0_i32_1 = arith.constant 0 : i32
    return %arg0, %c0_i32, %c0_i32_0 : i32, i32, i32
  }
  func.func @transform_1(%arg0: i32) -> (i32, i32) {
    %c0_i32 = arith.constant 0 : i32
    %c0_i32_0 = arith.constant 0 : i32
    %c0_i32_1 = arith.constant 0 : i32
    return %c0_i32, %c0_i32_0 : i32, i32
  }
  func.func @transform_2(%arg0: i32) -> (i32, i32) {
    %c0_i32 = arith.constant 0 : i32
    %c0_i32_0 = arith.constant 0 : i32
    %c0_i32_1 = arith.constant 0 : i32
    return %c0_i32, %c0_i32_0 : i32, i32
  }
  func.func @transform_3(%arg0: i32) -> (i32, i32) {
    %c0_i32 = arith.constant 0 : i32
    %c0_i32_0 = arith.constant 0 : i32
    %c0_i32_1 = arith.constant 0 : i32
    return %c0_i32, %c0_i32_0 : i32, i32
  }
  func.func @transform_4(%arg0: i32) -> (i32, i32) {
    %c0_i32 = arith.constant 0 : i32
    %c0_i32_0 = arith.constant 0 : i32
    %c0_i32_1 = arith.constant 0 : i32
    return %c0_i32, %c0_i32_0 : i32, i32
  }
  func.func @transform_5(%arg0: i32) -> (i32, i32) {
    %c0_i32 = arith.constant 0 : i32
    %c0_i32_0 = arith.constant 0 : i32
    %c0_i32_1 = arith.constant 0 : i32
    return %c0_i32, %c0_i32_0 : i32, i32
  }
  func.func @transform_6(%arg0: i32) -> (i32, i32) {
    %c0_i32 = arith.constant 0 : i32
    %c0_i32_0 = arith.constant 0 : i32
    %c0_i32_1 = arith.constant 0 : i32
    return %c0_i32, %c0_i32_0 : i32, i32
  }
  func.func @transform_7(%arg0: i32) -> (i32, i32, i32) {
    %c0_i32 = arith.constant 0 : i32
    %c0_i32_0 = arith.constant 0 : i32
    %c0_i32_1 = arith.constant 0 : i32
    %c0_i32_2 = arith.constant 0 : i32
    return %c0_i32, %c0_i32_0, %c0_i32_1 : i32, i32, i32
  }
  func.func @transform_8(%arg0: i32) -> (i32, i32) {
    %c0_i32 = arith.constant 0 : i32
    %c0_i32_0 = arith.constant 0 : i32
    %c0_i32_1 = arith.constant 0 : i32
    return %c0_i32, %c0_i32_0 : i32, i32
  }
  func.func @transform_9(%arg0: i32) -> (i32, i32, i32) {
    %c0_i32 = arith.constant 0 : i32
    %c0_i32_0 = arith.constant 0 : i32
    %c0_i32_1 = arith.constant 0 : i32
    return %arg0, %c0_i32, %c0_i32_0 : i32, i32, i32
  }
}

</mosaic_0001>

<llo_original>
// kernel: tpu_custom_call.1
$region0: #{tpu_custom_call.1}
  #allocation0 [shape = 'u32[]', space=smem, size = 0x4, offset = 0x4, fixed_abs, tag = 'smem constant byte address 0x4 - core index']
  #allocation1 [shape = 'u32[72,128]{1,0:T(1,128)}', space=vmem, size = 0x9000, scoped, tag = 'internal scratch']
  %s0 = inlined_call_operand.hbm [shape: f32[8,128], index: 0, kind: input, shape index: {}]
  %s1 = inlined_call_operand.hbm [shape: f32[16,128], index: 1, kind: output, shape index: {}]
  %s2 = sld [smem:[#allocation0]]
  $region41: #{tpu_custom_call.1} parent=0
    _
  %s4 = ssub.s32 1, %s2
  %s5 = scalar_select 0, %s4, %s2
  $region1: #{tpu_custom_call.1} parent=0
    #allocation2 [shape = 'u8[4096]{0}', space=vmem, size = 0x1000, scoped, tag = 'input window, operand 0, single buffered']
    #allocation3 [shape = 's32[2]{0}', space=sflag, size = 0x8, scoped, tag = 'scoped memory for tpu_custom_call.1']
    #allocation4 [shape = 's32[2]{0}', space=sflag, size = 0x8, scoped, tag = 'scoped memory for tpu_custom_call.1']
    #allocation5 [shape = 'u8[8192]{0}', space=vmem, size = 0x2000, scoped, tag = 'output window, operand 0']
    %6 = vsyncpa [#allocation3], 0
    %7 = vsyncpa [#allocation4], 0
    %s8 = scalar_lea.sflag [#allocation4], 1
    %9 = vsyncpa %s8, 0
    loop: start=0, step=1, limit=4
    $region2: #{tpu_custom_call.1} parent=1 // loop_pre_header
      _
    $region3: #{tpu_custom_call.1} parent=1 // loop_header
      %s11 = sphi 0, %s15
      %p12 = scmp.ge.s32.totalorder %s11, 4
      %s19 = sphi 0, %s19
      %s21 = sphi 0, %s19
      %s22 = sphi 0, %s21
      %s36 = sphi 0, %s22
      %s42 = sphi 0, %s44
      %s45 = sphi 0, %s42
      %s46 = sphi 0, %s45
      %s62 = sphi 0, %s46
    $region4: #{tpu_custom_call.1} parent=1 // loop_header_branch
      %14 = sbr.rel (%p12) target = $region8
    $region5: #{tpu_custom_call.1} parent=1 // loop_body
      %s16 = ssub.s32 %s11, 1
      %s17 = ssub.s32 %s11, 2
      %s18 = sadd.s32 %s11, 1
      %s20 = sadd.s32 %s19, 1
      %p23 = scmp.eq.s32.totalorder %s11, 1
      %p24 = scmp.ne.s32.totalorder %s19, %s21
      %p25 = scmp.eq.s32.totalorder %s11, 0
      %p26 = por %p24, %p25
      %p27 = scmp.ne.s32.totalorder %s19, %s21
      %p28 = scmp.eq.s32.totalorder %s16, 1
      %p29 = por %p27, %p28
      %p30 = scmp.ne.s32.totalorder %s21, %s22
      %p31 = scmp.eq.s32.totalorder %s16, 0
      %p32 = por %p30, %p31
      %p33 = scmp.ne.s32.totalorder %s21, %s22
      %p34 = scmp.eq.s32.totalorder %s17, 1
      %p35 = por %p33, %p34
      %p37 = scmp.ne.s32.totalorder %s22, %s36
      %p38 = scmp.eq.s32.totalorder %s17, 0
      %p39 = por %p37, %p38
      %s40 = ssub.s32 %s11, %s18
      %p41 = scmp.eq.s32.totalorder %s40, 0
      %s43 = sadd.s32 %s42, 1
      %s44 = scalar_select %p41, %s42, %s43
      %p47 = pneg %p41
      %p48 = scmp.eq.s32.totalorder %s11, 1
      %p49 = por %p47, %p48
      %p50 = scmp.ne.s32.totalorder %s42, %s45
      %p51 = scmp.eq.s32.totalorder %s11, 0
      %p52 = por %p50, %p51
      %p53 = scmp.ne.s32.totalorder %s42, %s45
      %p54 = scmp.eq.s32.totalorder %s16, 1
      %p55 = por %p53, %p54
      %p56 = scmp.ne.s32.totalorder %s45, %s46
      %p57 = scmp.eq.s32.totalorder %s16, 0
      %p58 = por %p56, %p57
      %p59 = scmp.ne.s32.totalorder %s45, %s46
      %p60 = scmp.eq.s32.totalorder %s17, 1
      %p61 = por %p59, %p60
      %p63 = scmp.ne.s32.totalorder %s46, %s62
      %p64 = scmp.eq.s32.totalorder %s17, 0
      %p65 = por %p63, %p64
      %p66 = scmp.le.s32.totalorder 1, %s11
      %p67 = scmp.lt.s32.totalorder %s11, 3
      %p68 = pnand %p66, %p67
      %p69 = pneg %p68
      // Predicated region
      $region9: #{tpu_custom_call.1} parent=5 // pred_check
        _
      $region10: #{tpu_custom_call.1} parent=5 // pred_check_branch
        %71 = sbr.rel (%p68) target = $region12
      $region11: #{tpu_custom_call.1} parent=5 // pred_region
        %s72 = ssub.s32 %s11, 1
        // Predicated region
        $region13: #{tpu_custom_call.1} parent=11 // pred_check
          %p73 = pneg %p32
        $region14: #{tpu_custom_call.1} parent=11 // pred_check_branch
          %75 = sbr.rel (%p73) target = $region16
        $region15: #{tpu_custom_call.1} parent=11 // pred_region
          %77 = vsyncadd [#allocation3], 0
          %s79 = sshll.u32 %s0, 4
          %s80 = int_to_ptr.hbm [resolvable:$true] %s79
          %s81 = sshll.u32 [#allocation2], 4
          %s82 = int_to_ptr.vmem [resolvable:$true] %s81
          %84 = dma.hbm_to_vmem [thread:$0]  %s80, 128, %s82, [#allocation3]
        $region16: #{tpu_custom_call.1} parent=11 // pred_fallthru
          _
      $region12: #{tpu_custom_call.1} parent=5 // pred_fallthru
        _
      %p85 = scmp.lt.s32.totalorder %s11, 2
      // Predicated region
      $region17: #{tpu_custom_call.1} parent=5 // pred_check
        %p86 = pneg %p85
      $region18: #{tpu_custom_call.1} parent=5 // pred_check_branch
        %88 = sbr.rel (%p86) target = $region20
      $region19: #{tpu_custom_call.1} parent=5 // pred_region
        _
      $region20: #{tpu_custom_call.1} parent=5 // pred_fallthru
        _
      %p89 = scmp.le.s32.totalorder 1, %s11
      %p90 = scmp.lt.s32.totalorder %s11, 3
      %p91 = pnand %p89, %p90
      %p92 = pneg %p91
      // Predicated region
      $region21: #{tpu_custom_call.1} parent=5 // pred_check
        _
      $region22: #{tpu_custom_call.1} parent=5 // pred_check_branch
        %94 = sbr.rel (%p91) target = $region24
      $region23: #{tpu_custom_call.1} parent=5 // pred_region
        %s95 = ssub.s32 %s11, 1
        // Predicated region
        $region25: #{tpu_custom_call.1} parent=23 // pred_check
          %p96 = pneg %p32
        $region26: #{tpu_custom_call.1} parent=23 // pred_check_branch
          %98 = sbr.rel (%p96) target = $region28
        $region27: #{tpu_custom_call.1} parent=23 // pred_region
          %100 = dma.done [#allocation3], 128
        $region28: #{tpu_custom_call.1} parent=23 // pred_fallthru
          _
        %p101 = pneg %p32
        %p102 = pneg %p29
        %p103 = pneg %p58
        %p104 = pneg %p55
        %s105 = sand.u32 %s45, 1
        %s106 = scalar_lea.sflag [#allocation4], %s105
        %s107 = sand.u32 %s45, 1
        %s108 = smul.addr %s107, 8
        %s109 = scalar_lea.vmem [#allocation5], %s108
        %v110 = vld [vmem:[#allocation2] sm:$0xff]
        %v111 = vmul.f32 %v110, 2.0
        %112 = vst [vmem:[%s109] sm:$0xff] %v111
        %s113 = sand.u32 %s45, 1
        %s114 = scalar_lea.sflag [#allocation4], %s113
        %s115 = sand.u32 %s45, 1
        %s116 = smul.addr %s115, 8
        %s117 = scalar_lea.vmem [#allocation5], %s116
        // Predicated region
        $region29: #{tpu_custom_call.1} parent=23 // pred_check
          %p118 = pneg %p55
        $region30: #{tpu_custom_call.1} parent=23 // pred_check_branch
          %120 = sbr.rel (%p118) target = $region32
        $region31: #{tpu_custom_call.1} parent=23 // pred_region
          %122 = vsyncadd %s114, 0
          %s123 = smul.addr %s16, 8
          %s124 = scalar_lea.hbm %s1, %s123
          %s126 = sshll.u32 %s117, 4
          %s127 = int_to_ptr.vmem [resolvable:$true] %s126
          %s128 = sshll.u32 %s124, 4
          %s129 = int_to_ptr.hbm [resolvable:$true] %s128
          %131 = dma.vmem_to_hbm [thread:$0]  %s127, 128, %s129, %s114
        $region32: #{tpu_custom_call.1} parent=23 // pred_fallthru
          _
      $region24: #{tpu_custom_call.1} parent=5 // pred_fallthru
        _
      %p132 = scmp.le.s32.totalorder 2, %s11
      // Predicated region
      $region33: #{tpu_custom_call.1} parent=5 // pred_check
        %p133 = pneg %p132
      $region34: #{tpu_custom_call.1} parent=5 // pred_check_branch
        %135 = sbr.rel (%p133) target = $region36
      $region35: #{tpu_custom_call.1} parent=5 // pred_region
        %s136 = ssub.s32 %s11, 2
        // Predicated region
        $region37: #{tpu_custom_call.1} parent=35 // pred_check
          %p137 = pneg %p61
        $region38: #{tpu_custom_call.1} parent=35 // pred_check_branch
          %139 = sbr.rel (%p137) target = $region40
        $region39: #{tpu_custom_call.1} parent=35 // pred_region
          %s140 = sand.u32 %s46, 1
          %s141 = scalar_lea.sflag [#allocation4], %s140
          %s142 = sand.u32 %s46, 1
          %s143 = smul.addr %s142, 8
          %s144 = scalar_lea.vmem [#allocation5], %s143
          %146 = dma.done %s141, 128
        $region40: #{tpu_custom_call.1} parent=35 // pred_fallthru
          _
      $region36: #{tpu_custom_call.1} parent=5 // pred_fallthru
        _
    $region6: #{tpu_custom_call.1} parent=1 // loop_footer
      %s15 = sadd.s32 1, %s11
    $region7: #{tpu_custom_call.1} parent=1 // loop_footer_branch
      %10 = sbr.rel target = $region3
    $region8: #{tpu_custom_call.1} parent=1 // loop_exit
      _
    %147 = vsyncpa [#allocation3], 1
    %s148 = scalar_lea.sflag [#allocation3], 1
    %149 = vsyncpa %s148, 1
    %150 = vsyncpa [#allocation4], 1
    %s151 = scalar_lea.sflag [#allocation4], 1
    %152 = vsyncpa %s151, 1

// kernel: tpu_custom_call.1
$region0: #{tpu_custom_call.1}
  #allocation0 [shape = 'u32[]', space=smem, size = 0x4, offset = 0x4, fixed_abs, tag = 'smem constant byte address 0x4 - core index']
  #allocation1 [shape = 'u32[72,128]{1,0:T(1,128)}', space=vmem, size = 0x9000, scoped, tag = 'internal scratch']
  %s0 = inlined_call_operand.hbm [shape: f32[2,8,32], index: 0, kind: input, shape index: {}]
  %s1 = inlined_call_operand.hbm [shape: f32[8,32], index: 1, kind: input, shape index: {}]
  %s2 = inlined_call_operand.vmem [shape: f32[1,32], index: 2, kind: input, shape index: {}]
  %s3 = inlined_call_operand.vmem [shape: f32[1,32], index: 3, kind: input, shape index: {}]
  %s4 = inlined_call_operand.vmem [shape: f32[1,32], index: 4, kind: input, shape index: {}]
  %s5 = inlined_call_operand.vmem [shape: f32[1,32], index: 5, kind: input, shape index: {}]
  %s6 = inlined_call_operand.hbm [shape: bf16[32,96], index: 6, kind: input, shape index: {}]
  %s7 = inlined_call_operand.hbm [shape: bf16[4,8,32], index: 7, kind: input, shape index: {}]
  %s8 = inlined_call_operand.vmem [shape: f32[1,32], index: 8, kind: input, shape index: {}]
  %s9 = inlined_call_operand.hbm [shape: bf16[2,8,32], index: 9, kind: output, shape index: {}]
  %s10 = sld [smem:[#allocation0]]
  $region85: #{tpu_custom_call.1} parent=0
    _
  %s12 = ssub.s32 1, %s10
  %s13 = scalar_select 0, %s12, %s10
  $region1: #{tpu_custom_call.1} parent=0
    #allocation2 [shape = 'u8[8192]{0}', space=vmem, size = 0x2000, scoped, tag = 'input window, operand 0']
    #allocation3 [shape = 's32[2]{0}', space=sflag, size = 0x8, scoped, tag = 'scoped memory for tpu_custom_call.1']
    #allocation4 [shape = 's32[2]{0}', space=sflag, size = 0x8, scoped, tag = 'scoped memory for tpu_custom_call.1']
    #allocation5 [shape = 'u8[4096]{0}', space=vmem, size = 0x1000, scoped, tag = 'input window, operand 1, single buffered']
    #allocation6 [shape = 's32[1]{0}', space=sflag, size = 0x4, scoped, tag = 'scoped memory for tpu_custom_call.1']
    #allocation7 [shape = 'u8[8192]{0}', space=vmem, size = 0x2000, scoped, tag = 'input window, operand 6, single buffered']
    #allocation8 [shape = 'u8[8192]{0}', space=vmem, size = 0x2000, scoped, tag = 'input window, operand 7, single buffered']
    #allocation9 [shape = 's32[1]{0}', space=sflag, size = 0x4, scoped, tag = 'scoped memory for tpu_custom_call.1']
    #allocation10 [shape = 'u8[4096]{0}', space=vmem, size = 0x1000, scoped, tag = 'output window, operand 0']
    %14 = vsyncpa [#allocation3], 0
    %s15 = scalar_lea.sflag [#allocation3], 1
    %16 = vsyncpa %s15, 0
    %17 = vsyncpa [#allocation6], 0
    %18 = vsyncpa [#allocation9], 0
    %19 = vsyncpa [#allocation4], 0
    %s20 = scalar_lea.sflag [#allocation4], 1
    %21 = vsyncpa %s20, 0
    loop: start=0, step=1, limit=4
    $region2: #{tpu_custom_call.1} parent=1 // loop_pre_header
      _
    $region3: #{tpu_custom_call.1} parent=1 // loop_header
      %s23 = sphi 0, %s27
      %p24 = scmp.ge.s32.totalorder %s23, 4
      %s33 = sphi 0, %s35
      %s36 = sphi 0, %s33
      %s37 = sphi 0, %s36
      %s53 = sphi 0, %s37
      %s57 = sphi 0, %s57
      %s59 = sphi 0, %s57
      %s60 = sphi 0, %s59
      %s74 = sphi 0, %s60
      %s78 = sphi 0, %s78
      %s80 = sphi 0, %s78
      %s81 = sphi 0, %s80
      %s95 = sphi 0, %s81
      %s99 = sphi 0, %s99
      %s101 = sphi 0, %s99
      %s102 = sphi 0, %s101
      %s116 = sphi 0, %s102
      %s120 = sphi 0, %s120
      %s122 = sphi 0, %s120
      %s123 = sphi 0, %s122
      %s137 = sphi 0, %s123
      %s141 = sphi 0, %s141
      %s143 = sphi 0, %s141
      %s144 = sphi 0, %s143
      %s158 = sphi 0, %s144
      %s162 = sphi 0, %s162
      %s164 = sphi 0, %s162
      %s165 = sphi 0, %s164
      %s179 = sphi 0, %s165
      %s183 = sphi 0, %s183
      %s185 = sphi 0, %s183
      %s186 = sphi 0, %s185
      %s200 = sphi 0, %s186
      %s204 = sphi 0, %s204
      %s206 = sphi 0, %s204
      %s207 = sphi 0, %s206
      %s221 = sphi 0, %s207
      %s227 = sphi 0, %s229
      %s230 = sphi 0, %s227
      %s231 = sphi 0, %s230
      %s247 = sphi 0, %s231
    $region4: #{tpu_custom_call.1} parent=1 // loop_header_branch
      %26 = sbr.rel (%p24) target = $region8
    $region5: #{tpu_custom_call.1} parent=1 // loop_body
      %s28 = ssub.s32 %s23, 1
      %s29 = ssub.s32 %s23, 2
      %s30 = sadd.s32 %s23, 1
      %s31 = ssub.s32 %s23, %s30
      %p32 = scmp.eq.s32.totalorder %s31, 0
      %s34 = sadd.s32 %s33, 1
      %s35 = scalar_select %p32, %s33, %s34
      %p38 = pneg %p32
      %p39 = scmp.eq.s32.totalorder %s23, 1
      %p40 = por %p38, %p39
      %p41 = scmp.ne.s32.totalorder %s33, %s36
      %p42 = scmp.eq.s32.totalorder %s23, 0
      %p43 = por %p41, %p42
      %p44 = scmp.ne.s32.totalorder %s33, %s36
      %p45 = scmp.eq.s32.totalorder %s28, 1
      %p46 = por %p44, %p45
      %p47 = scmp.ne.s32.totalorder %s36, %s37
      %p48 = scmp.eq.s32.totalorder %s28, 0
      %p49 = por %p47, %p48
      %p50 = scmp.ne.s32.totalorder %s36, %s37
      %p51 = scmp.eq.s32.totalorder %s29, 1
      %p52 = por %p50, %p51
      %p54 = scmp.ne.s32.totalorder %s37, %s53
      %p55 = scmp.eq.s32.totalorder %s29, 0
      %p56 = por %p54, %p55
      %s58 = sadd.s32 %s57, 1
      %p61 = scmp.eq.s32.totalorder %s23, 1
      %p62 = scmp.ne.s32.totalorder %s57, %s59
      %p63 = scmp.eq.s32.totalorder %s23, 0
      %p64 = por %p62, %p63
      %p65 = scmp.ne.s32.totalorder %s57, %s59
      %p66 = scmp.eq.s32.totalorder %s28, 1
      %p67 = por %p65, %p66
      %p68 = scmp.ne.s32.totalorder %s59, %s60
      %p69 = scmp.eq.s32.totalorder %s28, 0
      %p70 = por %p68, %p69
      %p71 = scmp.ne.s32.totalorder %s59, %s60
      %p72 = scmp.eq.s32.totalorder %s29, 1
      %p73 = por %p71, %p72
      %p75 = scmp.ne.s32.totalorder %s60, %s74
      %p76 = scmp.eq.s32.totalorder %s29, 0
      %p77 = por %p75, %p76
      %s79 = sadd.s32 %s78, 1
      %p82 = scmp.eq.s32.totalorder %s23, 1
      %p83 = scmp.ne.s32.totalorder %s78, %s80
      %p84 = scmp.eq.s32.totalorder %s23, 0
      %p85 = por %p83, %p84
      %p86 = scmp.ne.s32.totalorder %s78, %s80
      %p87 = scmp.eq.s32.totalorder %s28, 1
      %p88 = por %p86, %p87
      %p89 = scmp.ne.s32.totalorder %s80, %s81
      %p90 = scmp.eq.s32.totalorder %s28, 0
      %p91 = por %p89, %p90
      %p92 = scmp.ne.s32.totalorder %s80, %s81
      %p93 = scmp.eq.s32.totalorder %s29, 1
      %p94 = por %p92, %p93
      %p96 = scmp.ne.s32.totalorder %s81, %s95
      %p97 = scmp.eq.s32.totalorder %s29, 0
      %p98 = por %p96, %p97
      %s100 = sadd.s32 %s99, 1
      %p103 = scmp.eq.s32.totalorder %s23, 1
      %p104 = scmp.ne.s32.totalorder %s99, %s101
      %p105 = scmp.eq.s32.totalorder %s23, 0
      %p106 = por %p104, %p105
      %p107 = scmp.ne.s32.totalorder %s99, %s101
      %p108 = scmp.eq.s32.totalorder %s28, 1
      %p109 = por %p107, %p108
      %p110 = scmp.ne.s32.totalorder %s101, %s102
      %p111 = scmp.eq.s32.totalorder %s28, 0
      %p112 = por %p110, %p111
      %p113 = scmp.ne.s32.totalorder %s101, %s102
      %p114 = scmp.eq.s32.totalorder %s29, 1
      %p115 = por %p113, %p114
      %p117 = scmp.ne.s32.totalorder %s102, %s116
      %p118 = scmp.eq.s32.totalorder %s29, 0
      %p119 = por %p117, %p118
      %s121 = sadd.s32 %s120, 1
      %p124 = scmp.eq.s32.totalorder %s23, 1
      %p125 = scmp.ne.s32.totalorder %s120, %s122
      %p126 = scmp.eq.s32.totalorder %s23, 0
      %p127 = por %p125, %p126
      %p128 = scmp.ne.s32.totalorder %s120, %s122
      %p129 = scmp.eq.s32.totalorder %s28, 1
      %p130 = por %p128, %p129
      %p131 = scmp.ne.s32.totalorder %s122, %s123
      %p132 = scmp.eq.s32.totalorder %s28, 0
      %p133 = por %p131, %p132
      %p134 = scmp.ne.s32.totalorder %s122, %s123
      %p135 = scmp.eq.s32.totalorder %s29, 1
      %p136 = por %p134, %p135
      %p138 = scmp.ne.s32.totalorder %s123, %s137
      %p139 = scmp.eq.s32.totalorder %s29, 0
      %p140 = por %p138, %p139
      %s142 = sadd.s32 %s141, 1
      %p145 = scmp.eq.s32.totalorder %s23, 1
      %p146 = scmp.ne.s32.totalorder %s141, %s143
      %p147 = scmp.eq.s32.totalorder %s23, 0
      %p148 = por %p146, %p147
      %p149 = scmp.ne.s32.totalorder %s141, %s143
      %p150 = scmp.eq.s32.totalorder %s28, 1
      %p151 = por %p149, %p150
      %p152 = scmp.ne.s32.totalorder %s143, %s144
      %p153 = scmp.eq.s32.totalorder %s28, 0
      %p154 = por %p152, %p153
      %p155 = scmp.ne.s32.totalorder %s143, %s144
      %p156 = scmp.eq.s32.totalorder %s29, 1
      %p157 = por %p155, %p156
      %p159 = scmp.ne.s32.totalorder %s144, %s158
      %p160 = scmp.eq.s32.totalorder %s29, 0
      %p161 = por %p159, %p160
      %s163 = sadd.s32 %s162, 1
      %p166 = scmp.eq.s32.totalorder %s23, 1
      %p167 = scmp.ne.s32.totalorder %s162, %s164
      %p168 = scmp.eq.s32.totalorder %s23, 0
      %p169 = por %p167, %p168
      %p170 = scmp.ne.s32.totalorder %s162, %s164
      %p171 = scmp.eq.s32.totalorder %s28, 1
      %p172 = por %p170, %p171
      %p173 = scmp.ne.s32.totalorder %s164, %s165
      %p174 = scmp.eq.s32.totalorder %s28, 0
      %p175 = por %p173, %p174
      %p176 = scmp.ne.s32.totalorder %s164, %s165
      %p177 = scmp.eq.s32.totalorder %s29, 1
      %p178 = por %p176, %p177
      %p180 = scmp.ne.s32.totalorder %s165, %s179
      %p181 = scmp.eq.s32.totalorder %s29, 0
      %p182 = por %p180, %p181
      %s184 = sadd.s32 %s183, 1
      %p187 = scmp.eq.s32.totalorder %s23, 1
      %p188 = scmp.ne.s32.totalorder %s183, %s185
      %p189 = scmp.eq.s32.totalorder %s23, 0
      %p190 = por %p188, %p189
      %p191 = scmp.ne.s32.totalorder %s183, %s185
      %p192 = scmp.eq.s32.totalorder %s28, 1
      %p193 = por %p191, %p192
      %p194 = scmp.ne.s32.totalorder %s185, %s186
      %p195 = scmp.eq.s32.totalorder %s28, 0
      %p196 = por %p194, %p195
      %p197 = scmp.ne.s32.totalorder %s185, %s186
      %p198 = scmp.eq.s32.totalorder %s29, 1
      %p199 = por %p197, %p198
      %p201 = scmp.ne.s32.totalorder %s186, %s200
      %p202 = scmp.eq.s32.totalorder %s29, 0
      %p203 = por %p201, %p202
      %s205 = sadd.s32 %s204, 1
      %p208 = scmp.eq.s32.totalorder %s23, 1
      %p209 = scmp.ne.s32.totalorder %s204, %s206
      %p210 = scmp.eq.s32.totalorder %s23, 0
      %p211 = por %p209, %p210
      %p212 = scmp.ne.s32.totalorder %s204, %s206
      %p213 = scmp.eq.s32.totalorder %s28, 1
      %p214 = por %p212, %p213
      %p215 = scmp.ne.s32.totalorder %s206, %s207
      %p216 = scmp.eq.s32.totalorder %s28, 0
      %p217 = por %p215, %p216
      %p218 = scmp.ne.s32.totalorder %s206, %s207
      %p219 = scmp.eq.s32.totalorder %s29, 1
      %p220 = por %p218, %p219
      %p222 = scmp.ne.s32.totalorder %s207, %s221
      %p223 = scmp.eq.s32.totalorder %s29, 0
      %p224 = por %p222, %p223
      %s225 = ssub.s32 %s23, %s30
      %p226 = scmp.eq.s32.totalorder %s225, 0
      %s228 = sadd.s32 %s227, 1
      %s229 = scalar_select %p226, %s227, %s228
      %p232 = pneg %p226
      %p233 = scmp.eq.s32.totalorder %s23, 1
      %p234 = por %p232, %p233
      %p235 = scmp.ne.s32.totalorder %s227, %s230
      %p236 = scmp.eq.s32.totalorder %s23, 0
      %p237 = por %p235, %p236
      %p238 = scmp.ne.s32.totalorder %s227, %s230
      %p239 = scmp.eq.s32.totalorder %s28, 1
      %p240 = por %p238, %p239
      %p241 = scmp.ne.s32.totalorder %s230, %s231
      %p242 = scmp.eq.s32.totalorder %s28, 0
      %p243 = por %p241, %p242
      %p244 = scmp.ne.s32.totalorder %s230, %s231
      %p245 = scmp.eq.s32.totalorder %s29, 1
      %p246 = por %p244, %p245
      %p248 = scmp.ne.s32.totalorder %s231, %s247
      %p249 = scmp.eq.s32.totalorder %s29, 0
      %p250 = por %p248, %p249
      %p251 = scmp.le.s32.totalorder 1, %s23
      %p252 = scmp.lt.s32.totalorder %s23, 3
      %p253 = pnand %p251, %p252
      %p254 = pneg %p253
      // Predicated region
      $region9: #{tpu_custom_call.1} parent=5 // pred_check
        _
      $region10: #{tpu_custom_call.1} parent=5 // pred_check_branch
        %256 = sbr.rel (%p253) target = $region12
      $region11: #{tpu_custom_call.1} parent=5 // pred_region
        %s257 = ssub.s32 %s23, 1
        // Predicated region
        $region13: #{tpu_custom_call.1} parent=11 // pred_check
          %p258 = pneg %p70
        $region14: #{tpu_custom_call.1} parent=11 // pred_check_branch
          %260 = sbr.rel (%p258) target = $region16
        $region15: #{tpu_custom_call.1} parent=11 // pred_region
          %262 = vsyncadd [#allocation6], 0
          %s264 = sshll.u32 %s1, 4
          %s265 = int_to_ptr.hbm [resolvable:$true] %s264
          %s266 = sshll.u32 [#allocation5], 4
          %s267 = int_to_ptr.vmem [resolvable:$true] %s266
          %269 = dma.hbm_to_vmem [thread:$0]  %s265, 128, %s267, [#allocation6]
        $region16: #{tpu_custom_call.1} parent=11 // pred_fallthru
          _
        // Predicated region
        $region17: #{tpu_custom_call.1} parent=11 // pred_check
          %p270 = pneg %p91
        $region18: #{tpu_custom_call.1} parent=11 // pred_check_branch
          %272 = sbr.rel (%p270) target = $region20
        $region19: #{tpu_custom_call.1} parent=11 // pred_region
          _
        $region20: #{tpu_custom_call.1} parent=11 // pred_fallthru
          _
        // Predicated region
        $region21: #{tpu_custom_call.1} parent=11 // pred_check
          %p273 = pneg %p112
        $region22: #{tpu_custom_call.1} parent=11 // pred_check_branch
          %275 = sbr.rel (%p273) target = $region24
        $region23: #{tpu_custom_call.1} parent=11 // pred_region
          _
        $region24: #{tpu_custom_call.1} parent=11 // pred_fallthru
          _
        // Predicated region
        $region25: #{tpu_custom_call.1} parent=11 // pred_check
          %p276 = pneg %p133
        $region26: #{tpu_custom_call.1} parent=11 // pred_check_branch
          %278 = sbr.rel (%p276) target = $region28
        $region27: #{tpu_custom_call.1} parent=11 // pred_region
          _
        $region28: #{tpu_custom_call.1} parent=11 // pred_fallthru
          _
        // Predicated region
        $region29: #{tpu_custom_call.1} parent=11 // pred_check
          %p279 = pneg %p154
        $region30: #{tpu_custom_call.1} parent=11 // pred_check_branch
          %281 = sbr.rel (%p279) target = $region32
        $region31: #{tpu_custom_call.1} parent=11 // pred_region
          _
        $region32: #{tpu_custom_call.1} parent=11 // pred_fallthru
          _
        // Predicated region
        $region33: #{tpu_custom_call.1} parent=11 // pred_check
          %p282 = pneg %p175
        $region34: #{tpu_custom_call.1} parent=11 // pred_check_branch
          %284 = sbr.rel (%p282) target = $region36
        $region35: #{tpu_custom_call.1} parent=11 // pred_region
          %286 = vsyncadd [#allocation6], 0
          %s287 = sshll.u32 %s6, 4
          %s288 = int_to_ptr.hbm [resolvable:$true] %s287
          %s289 = sshll.u32 [#allocation7], 4
          %s290 = int_to_ptr.vmem [resolvable:$true] %s289
          %295 = dma.hbm_to_vmem [thread:$0]  %s288, 256, %s290, [#allocation6], 64, 64, 4
        $region36: #{tpu_custom_call.1} parent=11 // pred_fallthru
          _
        // Predicated region
        $region37: #{tpu_custom_call.1} parent=11 // pred_check
          %p296 = pneg %p196
        $region38: #{tpu_custom_call.1} parent=11 // pred_check_branch
          %298 = sbr.rel (%p296) target = $region40
        $region39: #{tpu_custom_call.1} parent=11 // pred_region
          %300 = vsyncadd [#allocation9], 0
          %s301 = sshll.u32 %s7, 4
          %s302 = int_to_ptr.hbm [resolvable:$true] %s301
          %s303 = sshll.u32 [#allocation8], 4
          %s304 = int_to_ptr.vmem [resolvable:$true] %s303
          %309 = dma.hbm_to_vmem [thread:$0]  %s302, 256, %s304, [#allocation9], 64, 64, 4
        $region40: #{tpu_custom_call.1} parent=11 // pred_fallthru
          _
        // Predicated region
        $region41: #{tpu_custom_call.1} parent=11 // pred_check
          %p310 = pneg %p217
        $region42: #{tpu_custom_call.1} parent=11 // pred_check_branch
          %312 = sbr.rel (%p310) target = $region44
        $region43: #{tpu_custom_call.1} parent=11 // pred_region
          _
        $region44: #{tpu_custom_call.1} parent=11 // pred_fallthru
          _
      $region12: #{tpu_custom_call.1} parent=5 // pred_fallthru
        _
      %p313 = scmp.lt.s32.totalorder %s23, 2
      // Predicated region
      $region45: #{tpu_custom_call.1} parent=5 // pred_check
        %p314 = pneg %p313
      $region46: #{tpu_custom_call.1} parent=5 // pred_check_branch
        %316 = sbr.rel (%p314) target = $region48
      $region47: #{tpu_custom_call.1} parent=5 // pred_region
        // Predicated region
        $region49: #{tpu_custom_call.1} parent=47 // pred_check
          %p317 = pneg %p43
        $region50: #{tpu_custom_call.1} parent=47 // pred_check_branch
          %319 = sbr.rel (%p317) target = $region52
        $region51: #{tpu_custom_call.1} parent=47 // pred_region
          %s320 = sand.u32 %s33, 1
          %s321 = scalar_lea.sflag [#allocation3], %s320
          %s322 = sand.u32 %s33, 1
          %s323 = smul.addr %s322, 8
          %s324 = scalar_lea.vmem [#allocation2], %s323
          %326 = vsyncadd %s321, 0
          %s327 = smul.addr %s23, 8
          %s328 = scalar_lea.hbm %s0, %s327
          %s330 = sshll.u32 %s328, 4
          %s331 = int_to_ptr.hbm [resolvable:$true] %s330
          %s332 = sshll.u32 %s324, 4
          %s333 = int_to_ptr.vmem [resolvable:$true] %s332
          %335 = dma.hbm_to_vmem [thread:$0]  %s331, 128, %s333, %s321
        $region52: #{tpu_custom_call.1} parent=47 // pred_fallthru
          _
      $region48: #{tpu_custom_call.1} parent=5 // pred_fallthru
        _
      %p336 = scmp.le.s32.totalorder 1, %s23
      %p337 = scmp.lt.s32.totalorder %s23, 3
      %p338 = pnand %p336, %p337
      %p339 = pneg %p338
      // Predicated region
      $region53: #{tpu_custom_call.1} parent=5 // pred_check
        _
      $region54: #{tpu_custom_call.1} parent=5 // pred_check_branch
        %341 = sbr.rel (%p338) target = $region56
      $region55: #{tpu_custom_call.1} parent=5 // pred_region
        %s342 = ssub.s32 %s23, 1
        %s343 = sand.u32 %s36, 1
        %s344 = scalar_lea.sflag [#allocation3], %s343
        %s345 = sand.u32 %s36, 1
        %s346 = smul.addr %s345, 8
        %s347 = scalar_lea.vmem [#allocation2], %s346
        // Predicated region
        $region57: #{tpu_custom_call.1} parent=55 // pred_check
          %p348 = pneg %p49
        $region58: #{tpu_custom_call.1} parent=55 // pred_check_branch
          %350 = sbr.rel (%p348) target = $region60
        $region59: #{tpu_custom_call.1} parent=55 // pred_region
          %352 = dma.done %s344, 128
        $region60: #{tpu_custom_call.1} parent=55 // pred_fallthru
          _
        // Predicated region
        $region61: #{tpu_custom_call.1} parent=55 // pred_check
          %p353 = pneg %p70
        $region62: #{tpu_custom_call.1} parent=55 // pred_check_branch
          %355 = sbr.rel (%p353) target = $region64
        $region63: #{tpu_custom_call.1} parent=55 // pred_region
          %357 = dma.done [#allocation6], 128
        $region64: #{tpu_custom_call.1} parent=55 // pred_fallthru
          _
        // Predicated region
        $region65: #{tpu_custom_call.1} parent=55 // pred_check
          %p358 = pneg %p175
        $region66: #{tpu_custom_call.1} parent=55 // pred_check_branch
          %360 = sbr.rel (%p358) target = $region68
        $region67: #{tpu_custom_call.1} parent=55 // pred_region
          %362 = dma.done [#allocation6], 256
        $region68: #{tpu_custom_call.1} parent=55 // pred_fallthru
          _
        // Predicated region
        $region69: #{tpu_custom_call.1} parent=55 // pred_check
          %p363 = pneg %p196
        $region70: #{tpu_custom_call.1} parent=55 // pred_check_branch
          %365 = sbr.rel (%p363) target = $region72
        $region71: #{tpu_custom_call.1} parent=55 // pred_region
          %367 = dma.done [#allocation9], 256
        $region72: #{tpu_custom_call.1} parent=55 // pred_fallthru
          _
        %s368 = sand.u32 %s36, 1
        %s369 = scalar_lea.sflag [#allocation3], %s368
        %s370 = sand.u32 %s36, 1
        %s371 = smul.addr %s370, 8
        %s372 = scalar_lea.vmem [#allocation2], %s371
        %p373 = pneg %p49
        %p374 = pneg %p46
        %p375 = pneg %p70
        %p376 = pneg %p67
        %p377 = pneg %p91
        %p378 = pneg %p88
        %p379 = pneg %p112
        %p380 = pneg %p109
        %p381 = pneg %p133
        %p382 = pneg %p130
        %p383 = pneg %p154
        %p384 = pneg %p151
        %p385 = pneg %p175
        %p386 = pneg %p172
        %p387 = pneg %p196
        %p388 = pneg %p193
        %p389 = pneg %p217
        %p390 = pneg %p214
        %p391 = pneg %p243
        %p392 = pneg %p240
        %s393 = sand.u32 %s230, 1
        %s394 = scalar_lea.sflag [#allocation4], %s393
        %s395 = sand.u32 %s230, 1
        %s396 = smul.addr %s395, 4
        %s397 = scalar_lea.vmem [#allocation10], %s396
        %v399 = vld [vmem:[%s347] sm:$0xff]
        %v400 = vld [vmem:[#allocation5] sm:$0xff]
        %v401 = vadd.f32 %v399, %v400
        %v402 = vld [vmem:[%s2] sm:$0x1]
        %v403 = vld [vmem:[%s3] sm:$0x1]
        %vm404 = vcmask 261120
        %v405 = vsel %vm404, %v401, 0.0
        %406 = vadd.xlane.f32.xlu0 %v405
        %v407 = vpop.xlane.xlu0 %406
        %v408 = vrcp.pop 32.0
        %v409 = vmul.f32 32.0, %v408
        %v410 = vsub.f32 1.0, %v409
        %v411 = vmul.f32 %v408, %v410
        %v412 = vadd.f32 %v408, %v411
        %vm413 = vweird.f32 %v408
        %v414 = vsel %vm413, %v408, %v412
        %v415 = vmul.f32 %v407, %v414
        %v416 = vsub.f32 %v401, %v415
        %v417 = vmul.f32 %v416, %v416
        %v418 = vsel %vm404, %v417, 0.0
        %419 = vadd.xlane.f32.xlu0 %v418
        %v420 = vpop.xlane.xlu0 %419
        %v421 = vmul.f32 %v420, %v414
        %v422 = vadd.f32 %v421, 1e-05
        %v423 = vrsqrt.pop %v422
        %v424 = vmul.f32 %v423, %v422
        %v425 = vmul.f32 %v424, %v423
        %v426 = vmul.f32 0.5, %v425
        %v427 = vsub.f32 1.5, %v426
        %v428 = vmul.f32 %v423, %v427
        %vm429 = vweird.f32 %v422
        %vm430 = vweird.f32 %v423
        %vm431 = vmor %vm429, %vm430
        %v432 = vsel %vm431, %v423, %v428
        %v433 = vmul.f32 %v416, %v432
        %v435 = vperm.slane %v402, 0
        %v437 = vmul.f32 %v433, %v435
        %v439 = vperm.slane %v403, 0
        %v441 = vadd.f32 %v437, %v439
        %v442 = vld [vmem:[%s4] sm:$0x1]
        %v443 = vld [vmem:[%s5] sm:$0x1]
        %v444 = vsel %vm404, %v441, 0.0
        %445 = vadd.xlane.f32.xlu0 %v444
        %v446 = vpop.xlane.xlu0 %445
        %v447 = vmul.f32 %v446, %v414
        %v448 = vsub.f32 %v441, %v447
        %v449 = vmul.f32 %v448, %v448
        %v450 = vsel %vm404, %v449, 0.0
        %451 = vadd.xlane.f32.xlu0 %v450
        %v452 = vpop.xlane.xlu0 %451
        %v453 = vmul.f32 %v452, %v414
        %v454 = vadd.f32 %v453, 1e-05
        %v455 = vrsqrt.pop %v454
        %v456 = vmul.f32 %v455, %v454
        %v457 = vmul.f32 %v456, %v455
        %v458 = vmul.f32 0.5, %v457
        %v459 = vsub.f32 1.5, %v458
        %v460 = vmul.f32 %v455, %v459
        %vm461 = vweird.f32 %v454
        %vm462 = vweird.f32 %v455
        %vm463 = vmor %vm461, %vm462
        %v464 = vsel %vm463, %v455, %v460
        %v465 = vmul.f32 %v448, %v464
        %v467 = vperm.slane %v442, 0
        %v469 = vmul.f32 %v465, %v467
        %v471 = vperm.slane %v443, 0
        %v473 = vadd.f32 %v469, %v471
        %v474 = vld [vmem:[#allocation7] sm:$0xf]
        %v475 = vld [vmem:[#allocation7 + $0x4] sm:$0xf]
        %v476 = vld [vmem:[#allocation7 + $0x8] sm:$0xf]
        %v477 = vld [vmem:[#allocation7 + $0xc] sm:$0xf]
        %v478 = vpack.c.bf16 %v473, %v473
        %v483 = vunpack.c.l.b16 %v474
        %v484 = vunpack.c.l.b16 %v475
        %v485 = vunpack.c.l.b16 %v476
        %v486 = vunpack.c.l.b16 %v477
        %v487 = vpack.c.b16 %v484, %v483
        %v488 = vpack.c.b16 %v486, %v485
        %v492 = vsel %vm404, %v478, 0
        %494 = vmatpush.bf16.msra.mxu0 0
        %495 = vmatpush.bf16.msra.mxu0 0
        %496 = vmatpush.bf16.msra.mxu0 0
        %497 = vmatpush.bf16.msra.mxu0 0
        %498 = vmatpush.bf16.msra.mxu0 0
        %499 = vmatpush.bf16.msra.mxu0 0
        %500 = vmatpush.bf16.msra.mxu0 %v488
        %501 = vmatpush.bf16.msra.mxu0 %v487
        %502 = vmatmul.bf16.gmra.mxu0 %v492
        %v503 = vpop.f32.mrf.mxu0
        %v504 = vadd.f32 0.0, %v503
        %v505 = vpop.f32.mrf.mxu0
        %506 = vdwg.mxu0
        %508 = vrot.lane.b32.xlu0 %v504, 120
        %v509 = vpop.permute.xlu0 %508
        %511 = vrot.lane.b32.xlu0 %v504, 112
        %v512 = vpop.permute.xlu0 %511
        %514 = vrot.lane.b32.xlu0 %v504, 104
        %v515 = vpop.permute.xlu0 %514
        %v517 = vpack.c.bf16 %v504, %v504
        %v518 = vpack.c.bf16 %v509, %v509
        %v519 = vpack.c.bf16 %v512, %v512
        %v520 = vpack.c.bf16 %v515, %v515
        %v522 = vunpack.c.l.b16 %v517
        %v523 = vpack.c.b16 %v522, %v522
        %524 = vrot.lane.b32.xlu0 %v523, 96
        %v525 = vpop.permute.xlu0 %524
        %vm526 = vcmask 64512
        %v528 = vsel %vm526, %v517, 0
        %v531 = vsel %vm526, %v525, 0
        %533 = vmatpush.bf16.xpose.msra.mxu0 0
        %534 = vmatpush.bf16.xpose.msra.mxu0 0
        %535 = vmatpush.bf16.xpose.msra.mxu0 0
        %536 = vmatpush.bf16.xpose.msra.mxu0 0
        %537 = vmatpush.bf16.xpose.msra.mxu0 0
        %538 = vmatpush.bf16.xpose.msra.mxu0 0
        %539 = vmatpush.bf16.xpose.msra.mxu0 0
        %540 = vmatpush.bf16.xpose.msra.mxu0 %v531
        %541 = vmatmul.bf16.gmra.mxu0 %v528
        %v542 = vpop.f32.mrf.mxu0
        %v543 = vadd.f32 0.0, %v542
        %v544 = vpop.f32.mrf.mxu0
        %545 = vdwg.mxu0
        %v547 = vunpack.c.l.b16 %v518
        %v548 = vpack.c.b16 %v547, %v547
        %549 = vrot.lane.b32.xlu0 %v548, 96
        %v550 = vpop.permute.xlu0 %549
        %v552 = vsel %vm526, %v518, 0
        %v555 = vsel %vm526, %v550, 0
        %557 = vmatpush.bf16.xpose.msra.mxu0 0
        %558 = vmatpush.bf16.xpose.msra.mxu0 0
        %559 = vmatpush.bf16.xpose.msra.mxu0 0
        %560 = vmatpush.bf16.xpose.msra.mxu0 0
        %561 = vmatpush.bf16.xpose.msra.mxu0 0
        %562 = vmatpush.bf16.xpose.msra.mxu0 0
        %563 = vmatpush.bf16.xpose.msra.mxu0 0
        %564 = vmatpush.bf16.xpose.msra.mxu0 %v555
        %565 = vmatmul.bf16.gmra.mxu0 %v552
        %v566 = vpop.f32.mrf.mxu0
        %v567 = vadd.f32 0.0, %v566
        %v568 = vpop.f32.mrf.mxu0
        %569 = vdwg.mxu0
        %v571 = vunpack.c.l.b16 %v519
        %v572 = vpack.c.b16 %v571, %v571
        %573 = vrot.lane.b32.xlu0 %v572, 96
        %v574 = vpop.permute.xlu0 %573
        %v576 = vsel %vm526, %v519, 0
        %v579 = vsel %vm526, %v574, 0
        %581 = vmatpush.bf16.xpose.msra.mxu0 0
        %582 = vmatpush.bf16.xpose.msra.mxu0 0
        %583 = vmatpush.bf16.xpose.msra.mxu0 0
        %584 = vmatpush.bf16.xpose.msra.mxu0 0
        %585 = vmatpush.bf16.xpose.msra.mxu0 0
        %586 = vmatpush.bf16.xpose.msra.mxu0 0
        %587 = vmatpush.bf16.xpose.msra.mxu0 0
        %588 = vmatpush.bf16.xpose.msra.mxu0 %v579
        %589 = vmatmul.bf16.gmra.mxu0 %v576
        %v590 = vpop.f32.mrf.mxu0
        %v591 = vadd.f32 0.0, %v590
        %v592 = vpop.f32.mrf.mxu0
        %593 = vdwg.mxu0
        %v595 = vunpack.c.l.b16 %v520
        %v596 = vpack.c.b16 %v595, %v595
        %597 = vrot.lane.b32.xlu0 %v596, 96
        %v598 = vpop.permute.xlu0 %597
        %v600 = vsel %vm526, %v520, 0
        %v603 = vsel %vm526, %v598, 0
        %605 = vmatpush.bf16.xpose.msra.mxu0 0
        %606 = vmatpush.bf16.xpose.msra.mxu0 0
        %607 = vmatpush.bf16.xpose.msra.mxu0 0
        %608 = vmatpush.bf16.xpose.msra.mxu0 0
        %609 = vmatpush.bf16.xpose.msra.mxu0 0
        %610 = vmatpush.bf16.xpose.msra.mxu0 0
        %611 = vmatpush.bf16.xpose.msra.mxu0 0
        %612 = vmatpush.bf16.xpose.msra.mxu0 %v603
        %613 = vmatmul.bf16.gmra.mxu0 %v600
        %v614 = vpop.f32.mrf.mxu0
        %v615 = vadd.f32 0.0, %v614
        %v616 = vpop.f32.mrf.mxu0
        %617 = vdwg.mxu0
        %v618 = vlaneseq
        %v619 = vshrl.u32 %v618, 7
        %v620 = vlaneseq
        %v621 = vand.u32 %v620, 127
        %vm622 = vcmp.le.s32.totalorder %v621, %v619
        %v623 = vsel %vm622, 1, 0
        %vm624 = vcmp.eq.s32.totalorder %v623, 1
        %v625 = vsel %vm624, %v543, -inf
        %v626 = vsel %vm624, %v567, -inf
        %v627 = vsel %vm624, %v591, -inf
        %v628 = vsel %vm624, %v615, -inf
        %v629 = vsel %vm526, %v625, -inf
        %630 = vmax.xlane.f32.xlu0 %v629
        %v631 = vpop.xlane.xlu0 %630
        %v632 = vsel %vm526, %v626, -inf
        %633 = vmax.xlane.f32.xlu0 %v632
        %v634 = vpop.xlane.xlu0 %633
        %v635 = vsel %vm526, %v627, -inf
        %636 = vmax.xlane.f32.xlu0 %v635
        %v637 = vpop.xlane.xlu0 %636
        %v638 = vsel %vm526, %v628, -inf
        %639 = vmax.xlane.f32.xlu0 %v638
        %v640 = vpop.xlane.xlu0 %639
        %v641 = vsub.f32 %v625, %v631
        %v642 = vsub.f32 %v626, %v634
        %v643 = vsub.f32 %v627, %v637
        %v644 = vsub.f32 %v628, %v640
        %v645 = vmul.f32 %v641, 1.442695
        %v646 = vpow.pop %v645
        %v647 = vmul.f32 %v642, 1.442695
        %v648 = vpow.pop %v647
        %v649 = vmul.f32 %v643, 1.442695
        %v650 = vpow.pop %v649
        %v651 = vmul.f32 %v644, 1.442695
        %v652 = vpow.pop %v651
        %v653 = vsel %vm526, %v646, 0.0
        %654 = vadd.xlane.f32.xlu0 %v653
        %v655 = vpop.xlane.xlu0 %654
        %v656 = vsel %vm526, %v648, 0.0
        %657 = vadd.xlane.f32.xlu0 %v656
        %v658 = vpop.xlane.xlu0 %657
        %v659 = vsel %vm526, %v650, 0.0
        %660 = vadd.xlane.f32.xlu0 %v659
        %v661 = vpop.xlane.xlu0 %660
        %v662 = vsel %vm526, %v652, 0.0
        %663 = vadd.xlane.f32.xlu0 %v662
        %v664 = vpop.xlane.xlu0 %663
        %v665 = vrcp.pop %v655
        %v666 = vrcp.pop %v658
        %v667 = vrcp.pop %v661
        %v668 = vrcp.pop %v664
        %v669 = vmul.f32 %v646, %v665
        %v670 = vmul.f32 %v648, %v666
        %v671 = vmul.f32 %v650, %v667
        %v672 = vmul.f32 %v652, %v668
        %v673 = vpack.c.bf16 %v669, %v669
        %v674 = vpack.c.bf16 %v670, %v670
        %v675 = vpack.c.bf16 %v671, %v671
        %v676 = vpack.c.bf16 %v672, %v672
        %677 = vrot.lane.b32.xlu0 %v523, 64
        %v678 = vpop.permute.xlu0 %677
        %v680 = vsel %vm526, %v673, 0
        %vm682 = vcmask 1043456
        %v684 = vsel %vm682, %v678, 0
        %686 = vmatpush.bf16.msra.mxu0 0
        %687 = vmatpush.bf16.msra.mxu0 0
        %688 = vmatpush.bf16.msra.mxu0 0
        %689 = vmatpush.bf16.msra.mxu0 0
        %690 = vmatpush.bf16.msra.mxu0 0
        %691 = vmatpush.bf16.msra.mxu0 0
        %692 = vmatpush.bf16.msra.mxu0 0
        %693 = vmatpush.bf16.msra.mxu0 %v684
        %694 = vmatmul.bf16.gmra.mxu0 %v680
        %v695 = vpop.f32.mrf.mxu0
        %v696 = vadd.f32 0.0, %v695
        %v697 = vpop.f32.mrf.mxu0
        %698 = vdwg.mxu0
        %699 = vrot.lane.b32.xlu0 %v548, 64
        %v700 = vpop.permute.xlu0 %699
        %v702 = vsel %vm526, %v674, 0
        %v705 = vsel %vm682, %v700, 0
        %707 = vmatpush.bf16.msra.mxu0 0
        %708 = vmatpush.bf16.msra.mxu0 0
        %709 = vmatpush.bf16.msra.mxu0 0
        %710 = vmatpush.bf16.msra.mxu0 0
        %711 = vmatpush.bf16.msra.mxu0 0
        %712 = vmatpush.bf16.msra.mxu0 0
        %713 = vmatpush.bf16.msra.mxu0 0
        %714 = vmatpush.bf16.msra.mxu0 %v705
        %715 = vmatmul.bf16.gmra.mxu0 %v702
        %v716 = vpop.f32.mrf.mxu0
        %v717 = vadd.f32 0.0, %v716
        %v718 = vpop.f32.mrf.mxu0
        %719 = vdwg.mxu0
        %720 = vrot.lane.b32.xlu0 %v572, 64
        %v721 = vpop.permute.xlu0 %720
        %v723 = vsel %vm526, %v675, 0
        %v726 = vsel %vm682, %v721, 0
        %728 = vmatpush.bf16.msra.mxu0 0
        %729 = vmatpush.bf16.msra.mxu0 0
        %730 = vmatpush.bf16.msra.mxu0 0
        %731 = vmatpush.bf16.msra.mxu0 0
        %732 = vmatpush.bf16.msra.mxu0 0
        %733 = vmatpush.bf16.msra.mxu0 0
        %734 = vmatpush.bf16.msra.mxu0 0
        %735 = vmatpush.bf16.msra.mxu0 %v726
        %736 = vmatmul.bf16.gmra.mxu0 %v723
        %v737 = vpop.f32.mrf.mxu0
        %v738 = vadd.f32 0.0, %v737
        %v739 = vpop.f32.mrf.mxu0
        %740 = vdwg.mxu0
        %741 = vrot.lane.b32.xlu0 %v596, 64
        %v742 = vpop.permute.xlu0 %741
        %v744 = vsel %vm526, %v676, 0
        %v747 = vsel %vm682, %v742, 0
        %749 = vmatpush.bf16.msra.mxu0 0
        %750 = vmatpush.bf16.msra.mxu0 0
        %751 = vmatpush.bf16.msra.mxu0 0
        %752 = vmatpush.bf16.msra.mxu0 0
        %753 = vmatpush.bf16.msra.mxu0 0
        %754 = vmatpush.bf16.msra.mxu0 0
        %755 = vmatpush.bf16.msra.mxu0 0
        %756 = vmatpush.bf16.msra.mxu0 %v747
        %757 = vmatmul.bf16.gmra.mxu0 %v744
        %v758 = vpop.f32.mrf.mxu0
        %v759 = vadd.f32 0.0, %v758
        %v760 = vpop.f32.mrf.mxu0
        %761 = vdwg.mxu0
        %v762 = vpack.c.bf16 %v696, %v696
        %v763 = vpack.c.bf16 %v717, %v717
        %v764 = vpack.c.bf16 %v738, %v738
        %v765 = vpack.c.bf16 %v759, %v759
        %v766 = vld [vmem:[#allocation8] sm:$0xf]
        %v767 = vld [vmem:[#allocation8 + $0x4] sm:$0xf]
        %v768 = vld [vmem:[#allocation8 + $0x8] sm:$0xf]
        %v769 = vld [vmem:[#allocation8 + $0xc] sm:$0xf]
        %v771 = vsel %vm526, %v762, 0
        %v774 = vsel %vm682, %v766, 0
        %776 = vmatpush.bf16.msra.mxu0 0
        %777 = vmatpush.bf16.msra.mxu0 0
        %778 = vmatpush.bf16.msra.mxu0 0
        %779 = vmatpush.bf16.msra.mxu0 0
        %780 = vmatpush.bf16.msra.mxu0 0
        %781 = vmatpush.bf16.msra.mxu0 0
        %782 = vmatpush.bf16.msra.mxu0 0
        %783 = vmatpush.bf16.msra.mxu0 %v774
        %784 = vmatmul.bf16.gmra.mxu0 %v771
        %v785 = vpop.f32.mrf.mxu0
        %v786 = vadd.f32 0.0, %v785
        %v787 = vpop.f32.mrf.mxu0
        %788 = vdwg.mxu0
        %v790 = vsel %vm526, %v763, 0
        %v793 = vsel %vm682, %v767, 0
        %795 = vmatpush.bf16.msra.mxu0 0
        %796 = vmatpush.bf16.msra.mxu0 0
        %797 = vmatpush.bf16.msra.mxu0 0
        %798 = vmatpush.bf16.msra.mxu0 0
        %799 = vmatpush.bf16.msra.mxu0 0
        %800 = vmatpush.bf16.msra.mxu0 0
        %801 = vmatpush.bf16.msra.mxu0 0
        %802 = vmatpush.bf16.msra.mxu0 %v793
        %803 = vmatmul.bf16.gmra.mxu0 %v790
        %v804 = vpop.f32.mrf.mxu0
        %v805 = vadd.f32 0.0, %v804
        %v806 = vpop.f32.mrf.mxu0
        %807 = vdwg.mxu0
        %v809 = vsel %vm526, %v764, 0
        %v812 = vsel %vm682, %v768, 0
        %814 = vmatpush.bf16.msra.mxu0 0
        %815 = vmatpush.bf16.msra.mxu0 0
        %816 = vmatpush.bf16.msra.mxu0 0
        %817 = vmatpush.bf16.msra.mxu0 0
        %818 = vmatpush.bf16.msra.mxu0 0
        %819 = vmatpush.bf16.msra.mxu0 0
        %820 = vmatpush.bf16.msra.mxu0 0
        %821 = vmatpush.bf16.msra.mxu0 %v812
        %822 = vmatmul.bf16.gmra.mxu0 %v809
        %v823 = vpop.f32.mrf.mxu0
        %v824 = vadd.f32 0.0, %v823
        %v825 = vpop.f32.mrf.mxu0
        %826 = vdwg.mxu0
        %v828 = vsel %vm526, %v765, 0
        %v831 = vsel %vm682, %v769, 0
        %833 = vmatpush.bf16.msra.mxu0 0
        %834 = vmatpush.bf16.msra.mxu0 0
        %835 = vmatpush.bf16.msra.mxu0 0
        %836 = vmatpush.bf16.msra.mxu0 0
        %837 = vmatpush.bf16.msra.mxu0 0
        %838 = vmatpush.bf16.msra.mxu0 0
        %839 = vmatpush.bf16.msra.mxu0 0
        %840 = vmatpush.bf16.msra.mxu0 %v831
        %841 = vmatmul.bf16.gmra.mxu0 %v828
        %v842 = vpop.f32.mrf.mxu0
        %v843 = vadd.f32 0.0, %v842
        %v844 = vpop.f32.mrf.mxu0
        %845 = vdwg.mxu0
        %v846 = vsel %vm404, %v786, 0.0
        %v847 = vsel %vm404, %v805, 0.0
        %v848 = vadd.f32 %v846, %v847
        %v849 = vsel %vm404, %v824, 0.0
        %v850 = vadd.f32 %v848, %v849
        %v851 = vsel %vm404, %v843, 0.0
        %v852 = vadd.f32 %v850, %v851
        %v853 = vld [vmem:[%s8] sm:$0x1]
        %v855 = vperm.slane %v853, 0
        %v857 = vadd.f32 %v852, %v855
        %v858 = vadd.f32 %v441, %v857
        %v859 = vpack.c.bf16 %v858, %v858
        %vm860 = vcmask 257024
        %861 = vst.msk [vmem:[%s397] sm:$0xf] %vm860, %v859
        %s862 = sand.u32 %s230, 1
        %s863 = scalar_lea.sflag [#allocation4], %s862
        %s864 = sand.u32 %s230, 1
        %s865 = smul.addr %s864, 4
        %s866 = scalar_lea.vmem [#allocation10], %s865
        // Predicated region
        $region73: #{tpu_custom_call.1} parent=55 // pred_check
          %p867 = pneg %p240
        $region74: #{tpu_custom_call.1} parent=55 // pred_check_branch
          %869 = sbr.rel (%p867) target = $region76
        $region75: #{tpu_custom_call.1} parent=55 // pred_region
          %871 = vsyncadd %s863, 0
          %s872 = smul.addr %s28, 4
          %s873 = scalar_lea.hbm %s9, %s872
          %s875 = sshll.u32 %s866, 4
          %s876 = int_to_ptr.vmem [resolvable:$true] %s875
          %s877 = sshll.u32 %s873, 4
          %s878 = int_to_ptr.hbm [resolvable:$true] %s877
          %880 = dma.vmem_to_hbm [thread:$0]  %s876, 64, %s878, %s863
        $region76: #{tpu_custom_call.1} parent=55 // pred_fallthru
          _
      $region56: #{tpu_custom_call.1} parent=5 // pred_fallthru
        _
      %p881 = scmp.le.s32.totalorder 2, %s23
      // Predicated region
      $region77: #{tpu_custom_call.1} parent=5 // pred_check
        %p882 = pneg %p881
      $region78: #{tpu_custom_call.1} parent=5 // pred_check_branch
        %884 = sbr.rel (%p882) target = $region80
      $region79: #{tpu_custom_call.1} parent=5 // pred_region
        %s885 = ssub.s32 %s23, 2
        // Predicated region
        $region81: #{tpu_custom_call.1} parent=79 // pred_check
          %p886 = pneg %p246
        $region82: #{tpu_custom_call.1} parent=79 // pred_check_branch
          %888 = sbr.rel (%p886) target = $region84
        $region83: #{tpu_custom_call.1} parent=79 // pred_region
          %s889 = sand.u32 %s231, 1
          %s890 = scalar_lea.sflag [#allocation4], %s889
          %s891 = sand.u32 %s231, 1
          %s892 = smul.addr %s891, 4
          %s893 = scalar_lea.vmem [#allocation10], %s892
          %895 = dma.done %s890, 64
        $region84: #{tpu_custom_call.1} parent=79 // pred_fallthru
          _
      $region80: #{tpu_custom_call.1} parent=5 // pred_fallthru
        _
    $region6: #{tpu_custom_call.1} parent=1 // loop_footer
      %s27 = sadd.s32 1, %s23
    $region7: #{tpu_custom_call.1} parent=1 // loop_footer_branch
      %22 = sbr.rel target = $region3
    $region8: #{tpu_custom_call.1} parent=1 // loop_exit
      _
    %896 = vsyncpa [#allocation3], 1
    %s897 = scalar_lea.sflag [#allocation3], 1
    %898 = vsyncpa %s897, 1
    %899 = vsyncpa [#allocation6], 1
    %900 = vsyncpa [#allocation9], 1
    %901 = vsyncpa [#allocation4], 1
    %s902 = scalar_lea.sflag [#allocation4], 1
    %903 = vsyncpa %s902, 1

</llo_original>
